<compile_context>
chip_gen: v6e
topology: v6e:2x2x1
jax: 0.10.0
libtpu: 0.0.40
codegen_flags: <defaults>
</compile_context>

<pallas_src>
import jax
import jax.numpy as jnp
from jax.experimental import pallas as pl
from jax.experimental.pallas import tpu as pltpu


HIDDEN = 256
TB_MAX = 2048          # max batch-tile (lane) width per grid step
SINGLE_TILE_MAX = 1024  # below this, one full-batch tile (overhead amortization wins)


# ----------------------------------------------------------------------------
# Elementwise dtype: bf16 on v6e/v7x (bf16 VPU), f32 elsewhere (v5e has none).
# ----------------------------------------------------------------------------
def _elementwise_dtype():
    try:
        kind = jax.devices()[0].device_kind.lower()
    except Exception:
        return jnp.float32
    if "v6" in kind or "v7" in kind:
        return jnp.bfloat16
    return jnp.float32


# ----------------------------------------------------------------------------
# Batch tiling: single tile for small B; otherwise lane-aligned tiles with
# at least 2 grid steps (v7x megacore) capped at TB_MAX.
# ----------------------------------------------------------------------------
def _choose_batch_tile(B):
    if B <= SINGLE_TILE_MAX:
        return B, 1                     # full-array block: no alignment constraints
    tb = min(TB_MAX, pl.cdiv(pl.cdiv(B, 2), 128) * 128)
    return tb, pl.cdiv(B, tb)


# ----------------------------------------------------------------------------
# Pallas kernel: whole Actor mu-head MLP for one batch tile, transposed layout.
#   x_ref  : (dim_obs, TB)      w*_ref : (out_features, in_features)
#   b*_ref : (out_features, 1)  o_ref  : (dim_action, TB)
# ----------------------------------------------------------------------------
def _make_kernel(ew_dtype):
    def kernel(x_ref, w1_ref, b1_ref, w2_ref, b2_ref, w3_ref, b3_ref,
               wmu_ref, bmu_ref, o_ref):

        def bias_relu(acc_f32, b_ref):
            a = acc_f32.astype(ew_dtype)
            b = b_ref[...].astype(ew_dtype)          # (H,1) lane-broadcast
            return jnp.maximum(a + b, 0.0)

        # Layer 1: (H, dim_obs) @ (dim_obs, TB).  Tiny K -> keep f32.
        h = jnp.dot(w1_ref[...], x_ref[...], preferred_element_type=jnp.float32)
        h = bias_relu(h, b1_ref)

        # Layers 2/3: bf16 weights & bf16 MXU inputs, f32 accumulation.
        h = jnp.dot(w2_ref[...], h.astype(jnp.bfloat16),
                    preferred_element_type=jnp.float32)
        h = bias_relu(h, b2_ref)

        h = jnp.dot(w3_ref[...], h.astype(jnp.bfloat16),
                    preferred_element_type=jnp.float32)
        h = bias_relu(h, b3_ref)

        # mu head: (dim_action, H) @ (H, TB) -> lane-dense (dim_action, TB),
        # then clamp(min=0).
        mu = jnp.dot(wmu_ref[...].astype(h.dtype), h,
                     preferred_element_type=jnp.float32) + bmu_ref[...]
        o_ref[...] = jnp.maximum(mu, 0.0)

    return kernel


# ----------------------------------------------------------------------------
# One-time param packing (hoisted OUT of the per-call path).
# Incoming weights are (in_features, out_features); kernel wants (out, in).
# ----------------------------------------------------------------------------
def prep_actor_params(params):
    (w1, b1, w2, b2, w3, b3, wmu, bmu) = params
    return (
        w1.T.astype(jnp.float32),            # (256, dim_obs)     tiny -> f32
        b1[:, None].astype(jnp.float32),     # (256, 1)
        w2.T.astype(jnp.bfloat16),           # (256, 256)         bf16: half the bytes
        b2[:, None].astype(jnp.float32),
        w3.T.astype(jnp.bfloat16),           # (256, 256)
        b3[:, None].astype(jnp.float32),
        wmu.T.astype(jnp.float32),           # (dim_action, 256)  tiny -> f32
        bmu[:, None].astype(jnp.float32),    # (dim_action, 1)
    )


# ----------------------------------------------------------------------------
# Per-call wrapper.
# ----------------------------------------------------------------------------
def iql_forward_pallas(states, prepped_params):
    """states: (B, dim_obs) f32 -> actions: (B, dim_action) f32, clamped at 0."""
    (w1t, b1, w2t, b2, w3t, b3, wmut, bmu) = prepped_params
    B, dim_obs = states.shape
    dim_action = wmut.shape[0]
    hidden = w2t.shape[0]

    # Batch on the lane axis: lane-dense reads AND lane-dense output stores.
    x_t = states.T                                  # (dim_obs, B)

    TB, steps = _choose_batch_tile(B)

    def batch_tile(i):   # tiles walk the lane (last) axis
        return (0, i)

    def resident(i):     # same block every step -> params stay VMEM-resident
        return (0, 0)

    out = pl.pallas_call(
        _make_kernel(_elementwise_dtype()),
        out_shape=jax.ShapeDtypeStruct((dim_action, B), jnp.float32),
        grid=(steps,),
        in_specs=[
            pl.BlockSpec((dim_obs, TB), batch_tile),
            pl.BlockSpec((hidden, dim_obs), resident),
            pl.BlockSpec((hidden, 1), resident),
            pl.BlockSpec((hidden, hidden), resident),
            pl.BlockSpec((hidden, 1), resident),
            pl.BlockSpec((hidden, hidden), resident),
            pl.BlockSpec((hidden, 1), resident),
            pl.BlockSpec((dim_action, hidden), resident),
            pl.BlockSpec((dim_action, 1), resident),
        ],
        out_specs=pl.BlockSpec((dim_action, TB), batch_tile),
        compiler_params=pltpu.CompilerParams(
            dimension_semantics=("parallel",),       # v7x: shard batch over 2 TCs
        ),
    )(x_t, w1t, b1, w2t, b2, w3t, b3, wmut, bmu)

    if dim_action == 1:
        return out.reshape(B, 1)   # (1,B)->(B,1): layout-identical, free reshape
    return out.T                   # small transpose only when dim_action > 1


# ----------------------------------------------------------------------------
# Deterministic parameter init (mimics nn.Linear default U(-1/sqrt(fan_in), +)).
# Stored as (in_features, out_features); prep_actor_params transposes for the kernel.
# ----------------------------------------------------------------------------
def _init_linear(key, fan_in, fan_out):
    kw, kb = jax.random.split(key)
    bound = 1.0 / jnp.sqrt(jnp.float32(fan_in))
    w = jax.random.uniform(kw, (fan_in, fan_out), jnp.float32, -bound, bound)
    b = jax.random.uniform(kb, (fan_out,), jnp.float32, -bound, bound)
    return w, b


def init_actor_params(key, dim_obs, dim_action, hidden=HIDDEN):
    keys = jax.random.split(key, 4)
    w1, b1 = _init_linear(keys[0], dim_obs, hidden)
    w2, b2 = _init_linear(keys[1], hidden, hidden)
    w3, b3 = _init_linear(keys[2], hidden, hidden)
    wmu, bmu = _init_linear(keys[3], hidden, dim_action)
    # NOTE: Actor.FC_std exists but is unused by IQL.forward (deterministic path).
    return (w1, b1, w2, b2, w3, b3, wmu, bmu)


# Pure-JAX f32 reference for the sanity check.
def iql_forward_ref(states, params):
    (w1, b1, w2, b2, w3, b3, wmu, bmu) = params
    h = jax.nn.relu(states @ w1 + b1)
    h = jax.nn.relu(h @ w2 + b2)
    h = jax.nn.relu(h @ w3 + b3)
    mu = h @ wmu + bmu
    return jnp.maximum(mu, 0.0)


if __name__ == "__main__":
    key = jax.random.PRNGKey(0)
    k_param, k_obs = jax.random.split(key)

    dim_obs, dim_action, batch = 3, 1, 8
    params = init_actor_params(k_param, dim_obs, dim_action)
    prepped = prep_actor_params(params)          # one-time, hoisted out of calls

    states = jax.random.normal(k_obs, (batch, dim_obs), jnp.float32)

    actions = iql_forward_pallas(states, prepped)
    actions = jax.block_until_ready(actions)

    ref = iql_forward_ref(states, params)
    assert actions.shape == (batch, dim_action)
    # bf16 hidden-layer weights (and bf16 elementwise on v6e/v7x) -> small
    # deviation from the pure-f32 reference.
    assert jnp.allclose(actions, ref, atol=3e-2, rtol=3e-2), (actions, ref)

    print("KERNEL_OK")
</pallas_src>

<mosaic_0001>
module attributes {stable_mosaic.version = 11 : i64} {
  func.func @kernel(%arg0: i32, %arg1: memref<3x8xf32, #tpu.memory_space<vmem>>, %arg2: memref<256x3xf32, #tpu.memory_space<vmem>>, %arg3: memref<256x1xf32, #tpu.memory_space<vmem>>, %arg4: memref<256x256xbf16, #tpu.memory_space<vmem>>, %arg5: memref<256x1xf32, #tpu.memory_space<vmem>>, %arg6: memref<256x256xbf16, #tpu.memory_space<vmem>>, %arg7: memref<256x1xf32, #tpu.memory_space<vmem>>, %arg8: memref<1x256xf32, #tpu.memory_space<vmem>>, %arg9: memref<1x1xf32, #tpu.memory_space<vmem>>, %arg10: memref<1x8xf32, #tpu.memory_space<vmem>>) attributes {dimension_semantics = [#tpu.dimension_semantics<parallel>], iteration_bounds = array<i64: 1>, scalar_prefetch = 0 : i64, scratch_operands = 0 : i64, tpu.core_type = #tpu.core_type<tc>, window_params = [{transform_indices = @transform_0, window_bounds = array<i64: 3, 8>}, {pipeline_mode = #tpu.pipeline_mode<synchronous>, transform_indices = @transform_1, window_bounds = array<i64: 256, 3>}, {pipeline_mode = #tpu.pipeline_mode<synchronous>, transform_indices = @transform_2, window_bounds = array<i64: 256, 1>}, {pipeline_mode = #tpu.pipeline_mode<synchronous>, transform_indices = @transform_3, window_bounds = array<i64: 256, 256>}, {pipeline_mode = #tpu.pipeline_mode<synchronous>, transform_indices = @transform_4, window_bounds = array<i64: 256, 1>}, {pipeline_mode = #tpu.pipeline_mode<synchronous>, transform_indices = @transform_5, window_bounds = array<i64: 256, 256>}, {pipeline_mode = #tpu.pipeline_mode<synchronous>, transform_indices = @transform_6, window_bounds = array<i64: 256, 1>}, {pipeline_mode = #tpu.pipeline_mode<synchronous>, transform_indices = @transform_7, window_bounds = array<i64: 1, 256>}, {pipeline_mode = #tpu.pipeline_mode<synchronous>, transform_indices = @transform_8, window_bounds = array<i64: 1, 1>}, {transform_indices = @transform_9, window_bounds = array<i64: 1, 8>}]} {
    %c0 = arith.constant 0 : index
    %c0_0 = arith.constant 0 : index
    %0 = vector.load %arg2[%c0, %c0_0] : memref<256x3xf32, #tpu.memory_space<vmem>>, vector<256x3xf32>
    %c0_1 = arith.constant 0 : index
    %c0_2 = arith.constant 0 : index
    %1 = vector.load %arg1[%c0_1, %c0_2] : memref<3x8xf32, #tpu.memory_space<vmem>>, vector<3x8xf32>
    %cst = arith.constant dense<0.000000e+00> : vector<256x8xf32>
    %2 = tpu.matmul %0, %1, %cst {dimension_numbers = #tpu.dot_dimension_numbers<[1], [0], [0], [1], [0, 0, 1, 1], [], []>} : vector<256x3xf32>, vector<3x8xf32>, vector<256x8xf32> -> vector<256x8xf32>
    %c0_3 = arith.constant 0 : index
    %c0_4 = arith.constant 0 : index
    %3 = vector.load %arg3[%c0_3, %c0_4] : memref<256x1xf32, #tpu.memory_space<vmem>>, vector<256x1xf32>
    %4 = vector.broadcast %3 : vector<256x1xf32> to vector<256x8xf32>
    %5 = arith.addf %2, %4 : vector<256x8xf32>
    %cst_5 = arith.constant 0.000000e+00 : f32
    %6 = vector.broadcast %cst_5 : f32 to vector<256x8xf32>
    %7 = arith.maximumf %5, %6 : vector<256x8xf32>
    %c0_6 = arith.constant 0 : index
    %c0_7 = arith.constant 0 : index
    %8 = vector.load %arg4[%c0_6, %c0_7] : memref<256x256xbf16, #tpu.memory_space<vmem>>, vector<256x256xbf16>
    %9 = arith.truncf %7 : vector<256x8xf32> to vector<256x8xbf16>
    %cst_8 = arith.constant dense<0.000000e+00> : vector<256x8xf32>
    %10 = tpu.matmul %8, %9, %cst_8 {dimension_numbers = #tpu.dot_dimension_numbers<[1], [0], [0], [1], [0, 0, 1, 1], [], []>} : vector<256x256xbf16>, vector<256x8xbf16>, vector<256x8xf32> -> vector<256x8xf32>
    %c0_9 = arith.constant 0 : index
    %c0_10 = arith.constant 0 : index
    %11 = vector.load %arg5[%c0_9, %c0_10] : memref<256x1xf32, #tpu.memory_space<vmem>>, vector<256x1xf32>
    %12 = vector.broadcast %11 : vector<256x1xf32> to vector<256x8xf32>
    %13 = arith.addf %10, %12 : vector<256x8xf32>
    %cst_11 = arith.constant 0.000000e+00 : f32
    %14 = vector.broadcast %cst_11 : f32 to vector<256x8xf32>
    %15 = arith.maximumf %13, %14 : vector<256x8xf32>
    %c0_12 = arith.constant 0 : index
    %c0_13 = arith.constant 0 : index
    %16 = vector.load %arg6[%c0_12, %c0_13] : memref<256x256xbf16, #tpu.memory_space<vmem>>, vector<256x256xbf16>
    %17 = arith.truncf %15 : vector<256x8xf32> to vector<256x8xbf16>
    %cst_14 = arith.constant dense<0.000000e+00> : vector<256x8xf32>
    %18 = tpu.matmul %16, %17, %cst_14 {dimension_numbers = #tpu.dot_dimension_numbers<[1], [0], [0], [1], [0, 0, 1, 1], [], []>} : vector<256x256xbf16>, vector<256x8xbf16>, vector<256x8xf32> -> vector<256x8xf32>
    %c0_15 = arith.constant 0 : index
    %c0_16 = arith.constant 0 : index
    %19 = vector.load %arg7[%c0_15, %c0_16] : memref<256x1xf32, #tpu.memory_space<vmem>>, vector<256x1xf32>
    %20 = vector.broadcast %19 : vector<256x1xf32> to vector<256x8xf32>
    %21 = arith.addf %18, %20 : vector<256x8xf32>
    %cst_17 = arith.constant 0.000000e+00 : f32
    %22 = vector.broadcast %cst_17 : f32 to vector<256x8xf32>
    %23 = arith.maximumf %21, %22 : vector<256x8xf32>
    %c0_18 = arith.constant 0 : index
    %c0_19 = arith.constant 0 : index
    %24 = vector.load %arg8[%c0_18, %c0_19] : memref<1x256xf32, #tpu.memory_space<vmem>>, vector<1x256xf32>
    %cst_20 = arith.constant dense<0.000000e+00> : vector<1x8xf32>
    %25 = tpu.matmul %24, %23, %cst_20 {dimension_numbers = #tpu.dot_dimension_numbers<[1], [0], [0], [1], [0, 0, 1, 1], [], []>} : vector<1x256xf32>, vector<256x8xf32>, vector<1x8xf32> -> vector<1x8xf32>
    %c0_21 = arith.constant 0 : index
    %c0_22 = arith.constant 0 : index
    %26 = vector.load %arg9[%c0_21, %c0_22] : memref<1x1xf32, #tpu.memory_space<vmem>>, vector<1x1xf32>
    %27 = vector.broadcast %26 : vector<1x1xf32> to vector<1x8xf32>
    %28 = arith.addf %25, %27 : vector<1x8xf32>
    %cst_23 = arith.constant 0.000000e+00 : f32
    %29 = vector.broadcast %cst_23 : f32 to vector<1x8xf32>
    %30 = arith.maximumf %28, %29 : vector<1x8xf32>
    %c0_24 = arith.constant 0 : index
    %c0_25 = arith.constant 0 : index
    %31 = vector.load %arg10[%c0_24, %c0_25] : memref<1x8xf32, #tpu.memory_space<vmem>>, vector<1x8xf32>
    tpu.vector_store %arg10[%c0_24, %c0_25], %30 {strides = array<i32>} : memref<1x8xf32, #tpu.memory_space<vmem>>, vector<1x8xf32>,
    return
  }
  func.func @transform_0(%arg0: i32) -> (i32, i32) {
    %c0_i32 = arith.constant 0 : i32
    %c0_i32_0 = arith.constant 0 : i32
    return %c0_i32, %arg0 : i32, i32
  }
  func.func @transform_1(%arg0: i32) -> (i32, i32) {
    %c0_i32 = arith.constant 0 : i32
    %c0_i32_0 = arith.constant 0 : i32
    %c0_i32_1 = arith.constant 0 : i32
    return %c0_i32, %c0_i32_0 : i32, i32
  }
  func.func @transform_2(%arg0: i32) -> (i32, i32) {
    %c0_i32 = arith.constant 0 : i32
    %c0_i32_0 = arith.constant 0 : i32
    %c0_i32_1 = arith.constant 0 : i32
    return %c0_i32, %c0_i32_0 : i32, i32
  }
  func.func @transform_3(%arg0: i32) -> (i32, i32) {
    %c0_i32 = arith.constant 0 : i32
    %c0_i32_0 = arith.constant 0 : i32
    %c0_i32_1 = arith.constant 0 : i32
    return %c0_i32, %c0_i32_0 : i32, i32
  }
  func.func @transform_4(%arg0: i32) -> (i32, i32) {
    %c0_i32 = arith.constant 0 : i32
    %c0_i32_0 = arith.constant 0 : i32
    %c0_i32_1 = arith.constant 0 : i32
    return %c0_i32, %c0_i32_0 : i32, i32
  }
  func.func @transform_5(%arg0: i32) -> (i32, i32) {
    %c0_i32 = arith.constant 0 : i32
    %c0_i32_0 = arith.constant 0 : i32
    %c0_i32_1 = arith.constant 0 : i32
    return %c0_i32, %c0_i32_0 : i32, i32
  }
  func.func @transform_6(%arg0: i32) -> (i32, i32) {
    %c0_i32 = arith.constant 0 : i32
    %c0_i32_0 = arith.constant 0 : i32
    %c0_i32_1 = arith.constant 0 : i32
    return %c0_i32, %c0_i32_0 : i32, i32
  }
  func.func @transform_7(%arg0: i32) -> (i32, i32) {
    %c0_i32 = arith.constant 0 : i32
    %c0_i32_0 = arith.constant 0 : i32
    %c0_i32_1 = arith.constant 0 : i32
    return %c0_i32, %c0_i32_0 : i32, i32
  }
  func.func @transform_8(%arg0: i32) -> (i32, i32) {
    %c0_i32 = arith.constant 0 : i32
    %c0_i32_0 = arith.constant 0 : i32
    %c0_i32_1 = arith.constant 0 : i32
    return %c0_i32, %c0_i32_0 : i32, i32
  }
  func.func @transform_9(%arg0: i32) -> (i32, i32) {
    %c0_i32 = arith.constant 0 : i32
    %c0_i32_0 = arith.constant 0 : i32
    return %c0_i32, %arg0 : i32, i32
  }
}

</mosaic_0001>

<llo_original>
// kernel: tpu_custom_call.1
$region0: #{tpu_custom_call.1}
  #allocation0 [shape = 'u32[]', space=smem, size = 0x4, offset = 0x4, fixed_abs, tag = 'smem constant byte address 0x4 - core index']
  #allocation1 [shape = 'u32[144,128]{1,0:T(1,128)}', space=vmem, size = 0x12000, scoped, tag = 'internal scratch']
  #allocation2 [shape = 'f32[1,1]{1,0:T(1,128)S(1)}', space=vmem, size = 0x200, scoped, tag = 'scoped memory for tpu_custom_call.1']
  %s0 = inlined_call_operand.vmem [shape: f32[3,8], index: 0, kind: input, shape index: {}]
  %s1 = inlined_call_operand.vmem [shape: f32[256,3], index: 1, kind: input, shape index: {}]
  %s2 = inlined_call_operand.vmem [shape: f32[256,1], index: 2, kind: input, shape index: {}]
  %s3 = inlined_call_operand.vmem [shape: bf16[256,256], index: 3, kind: input, shape index: {}]
  %s4 = inlined_call_operand.vmem [shape: f32[256,1], index: 4, kind: input, shape index: {}]
  %s5 = inlined_call_operand.vmem [shape: bf16[256,256], index: 5, kind: input, shape index: {}]
  %s6 = inlined_call_operand.vmem [shape: f32[256,1], index: 6, kind: input, shape index: {}]
  %s7 = inlined_call_operand.vmem [shape: f32[1,256], index: 7, kind: input, shape index: {}]
  %s8 = inlined_call_operand.<no memory space> [shape: f32[1,1], index: 8, kind: input, shape index: {}]
  %s9 = inlined_call_operand.hbm [shape: f32[1,8], index: 9, kind: output, shape index: {}]
  %s10 = sld [smem:[#allocation0]]
  $region46: #{tpu_custom_call.1} parent=0
    _
  %s12 = ssub.s32 1, %s10
  %s13 = scalar_select 0, %s12, %s10
  %v14 = vstv %s8
  %15 = vst [vmem:[#allocation2] sm:$0x1] %v14
  $region1: #{tpu_custom_call.1} parent=0
    #allocation3 [shape = 'u8[512]{0}', space=vmem, size = 0x400, scoped, tag = 'output window, operand 0, single buffered']
    #allocation4 [shape = 's32[1]{0}', space=sflag, size = 0x4, scoped, tag = 'scoped memory for tpu_custom_call.1']
    %16 = vsyncpa [#allocation4], 0
    // Predicated region
    $region2: #{tpu_custom_call.1} parent=1 // pred_check
      _
    $region3: #{tpu_custom_call.1} parent=1 // pred_check_branch
      %18 = sbr.rel (0) target = $region5
    $region4: #{tpu_custom_call.1} parent=1 // pred_region
      _
    $region5: #{tpu_custom_call.1} parent=1 // pred_fallthru
      _
    // Predicated region
    $region6: #{tpu_custom_call.1} parent=1 // pred_check
      _
    $region7: #{tpu_custom_call.1} parent=1 // pred_check_branch
      %20 = sbr.rel (0) target = $region9
    $region8: #{tpu_custom_call.1} parent=1 // pred_region
      _
    $region9: #{tpu_custom_call.1} parent=1 // pred_fallthru
      _
    // Predicated region
    $region10: #{tpu_custom_call.1} parent=1 // pred_check
      _
    $region11: #{tpu_custom_call.1} parent=1 // pred_check_branch
      %22 = sbr.rel (0) target = $region13
    $region12: #{tpu_custom_call.1} parent=1 // pred_region
      _
    $region13: #{tpu_custom_call.1} parent=1 // pred_fallthru
      _
    // Predicated region
    $region14: #{tpu_custom_call.1} parent=1 // pred_check
      _
    $region15: #{tpu_custom_call.1} parent=1 // pred_check_branch
      %24 = sbr.rel (0) target = $region17
    $region16: #{tpu_custom_call.1} parent=1 // pred_region
      _
    $region17: #{tpu_custom_call.1} parent=1 // pred_fallthru
      _
    // Predicated region
    $region18: #{tpu_custom_call.1} parent=1 // pred_check
      _
    $region19: #{tpu_custom_call.1} parent=1 // pred_check_branch
      %26 = sbr.rel (0) target = $region21
    $region20: #{tpu_custom_call.1} parent=1 // pred_region
      _
    $region21: #{tpu_custom_call.1} parent=1 // pred_fallthru
      _
    // Predicated region
    $region22: #{tpu_custom_call.1} parent=1 // pred_check
      _
    $region23: #{tpu_custom_call.1} parent=1 // pred_check_branch
      %28 = sbr.rel (0) target = $region25
    $region24: #{tpu_custom_call.1} parent=1 // pred_region
      _
    $region25: #{tpu_custom_call.1} parent=1 // pred_fallthru
      _
    // Predicated region
    $region26: #{tpu_custom_call.1} parent=1 // pred_check
      _
    $region27: #{tpu_custom_call.1} parent=1 // pred_check_branch
      %30 = sbr.rel (0) target = $region29
    $region28: #{tpu_custom_call.1} parent=1 // pred_region
      _
    $region29: #{tpu_custom_call.1} parent=1 // pred_fallthru
      _
    // Predicated region
    $region30: #{tpu_custom_call.1} parent=1 // pred_check
      _
    $region31: #{tpu_custom_call.1} parent=1 // pred_check_branch
      %32 = sbr.rel (0) target = $region33
    $region32: #{tpu_custom_call.1} parent=1 // pred_region
      _
    $region33: #{tpu_custom_call.1} parent=1 // pred_fallthru
      _
    // Predicated region
    $region34: #{tpu_custom_call.1} parent=1 // pred_check
      _
    $region35: #{tpu_custom_call.1} parent=1 // pred_check_branch
      %34 = sbr.rel (0) target = $region37
    $region36: #{tpu_custom_call.1} parent=1 // pred_region
      _
    $region37: #{tpu_custom_call.1} parent=1 // pred_fallthru
      _
    %v36 = vld [vmem:[%s1] sm:$0xff]
    %v37 = vld [vmem:[%s1 + $0x8] sm:$0xff]
    %v38 = vld [vmem:[%s1 + $0x10] sm:$0xff]
    %v39 = vld [vmem:[%s1 + $0x18] sm:$0xff]
    %v40 = vld [vmem:[%s1 + $0x20] sm:$0xff]
    %v41 = vld [vmem:[%s1 + $0x28] sm:$0xff]
    %v42 = vld [vmem:[%s1 + $0x30] sm:$0xff]
    %v43 = vld [vmem:[%s1 + $0x38] sm:$0xff]
    %v44 = vld [vmem:[%s1 + $0x40] sm:$0xff]
    %v45 = vld [vmem:[%s1 + $0x48] sm:$0xff]
    %v46 = vld [vmem:[%s1 + $0x50] sm:$0xff]
    %v47 = vld [vmem:[%s1 + $0x58] sm:$0xff]
    %v48 = vld [vmem:[%s1 + $0x60] sm:$0xff]
    %v49 = vld [vmem:[%s1 + $0x68] sm:$0xff]
    %v50 = vld [vmem:[%s1 + $0x70] sm:$0xff]
    %v51 = vld [vmem:[%s1 + $0x78] sm:$0xff]
    %v52 = vld [vmem:[%s1 + $0x80] sm:$0xff]
    %v53 = vld [vmem:[%s1 + $0x88] sm:$0xff]
    %v54 = vld [vmem:[%s1 + $0x90] sm:$0xff]
    %v55 = vld [vmem:[%s1 + $0x98] sm:$0xff]
    %v56 = vld [vmem:[%s1 + $0xa0] sm:$0xff]
    %v57 = vld [vmem:[%s1 + $0xa8] sm:$0xff]
    %v58 = vld [vmem:[%s1 + $0xb0] sm:$0xff]
    %v59 = vld [vmem:[%s1 + $0xb8] sm:$0xff]
    %v60 = vld [vmem:[%s1 + $0xc0] sm:$0xff]
    %v61 = vld [vmem:[%s1 + $0xc8] sm:$0xff]
    %v62 = vld [vmem:[%s1 + $0xd0] sm:$0xff]
    %v63 = vld [vmem:[%s1 + $0xd8] sm:$0xff]
    %v64 = vld [vmem:[%s1 + $0xe0] sm:$0xff]
    %v65 = vld [vmem:[%s1 + $0xe8] sm:$0xff]
    %v66 = vld [vmem:[%s1 + $0xf0] sm:$0xff]
    %v67 = vld [vmem:[%s1 + $0xf8] sm:$0xff]
    %v68 = vld [vmem:[%s0] sm:$0x7]
    %v69 = vld [vmem:[%s2] sm:$0xff]
    %v70 = vld [vmem:[%s2 + $0x8] sm:$0xff]
    %v71 = vld [vmem:[%s2 + $0x10] sm:$0xff]
    %v72 = vld [vmem:[%s2 + $0x18] sm:$0xff]
    %v73 = vld [vmem:[%s2 + $0x20] sm:$0xff]
    %v74 = vld [vmem:[%s2 + $0x28] sm:$0xff]
    %v75 = vld [vmem:[%s2 + $0x30] sm:$0xff]
    %v76 = vld [vmem:[%s2 + $0x38] sm:$0xff]
    %v77 = vld [vmem:[%s2 + $0x40] sm:$0xff]
    %v78 = vld [vmem:[%s2 + $0x48] sm:$0xff]
    %v79 = vld [vmem:[%s2 + $0x50] sm:$0xff]
    %v80 = vld [vmem:[%s2 + $0x58] sm:$0xff]
    %v81 = vld [vmem:[%s2 + $0x60] sm:$0xff]
    %v82 = vld [vmem:[%s2 + $0x68] sm:$0xff]
    %v83 = vld [vmem:[%s2 + $0x70] sm:$0xff]
    %v84 = vld [vmem:[%s2 + $0x78] sm:$0xff]
    %v85 = vld [vmem:[%s2 + $0x80] sm:$0xff]
    %v86 = vld [vmem:[%s2 + $0x88] sm:$0xff]
    %v87 = vld [vmem:[%s2 + $0x90] sm:$0xff]
    %v88 = vld [vmem:[%s2 + $0x98] sm:$0xff]
    %v89 = vld [vmem:[%s2 + $0xa0] sm:$0xff]
    %v90 = vld [vmem:[%s2 + $0xa8] sm:$0xff]
    %v91 = vld [vmem:[%s2 + $0xb0] sm:$0xff]
    %v92 = vld [vmem:[%s2 + $0xb8] sm:$0xff]
    %v93 = vld [vmem:[%s2 + $0xc0] sm:$0xff]
    %v94 = vld [vmem:[%s2 + $0xc8] sm:$0xff]
    %v95 = vld [vmem:[%s2 + $0xd0] sm:$0xff]
    %v96 = vld [vmem:[%s2 + $0xd8] sm:$0xff]
    %v97 = vld [vmem:[%s2 + $0xe0] sm:$0xff]
    %v98 = vld [vmem:[%s2 + $0xe8] sm:$0xff]
    %v99 = vld [vmem:[%s2 + $0xf0] sm:$0xff]
    %v100 = vld [vmem:[%s2 + $0xf8] sm:$0xff]
    %102 = vset.pattern.permute.xlu0 0
    %103 = vperm.xlu0 %102, %v69
    %v104 = vpop.permute.xlu0 %103
    %107 = vset.pattern.permute.xlu0 0
    %108 = vperm.xlu0 %107, %v70
    %v109 = vpop.permute.xlu0 %108
    %112 = vset.pattern.permute.xlu0 0
    %113 = vperm.xlu0 %112, %v71
    %v114 = vpop.permute.xlu0 %113
    %117 = vset.pattern.permute.xlu0 0
    %118 = vperm.xlu0 %117, %v72
    %v119 = vpop.permute.xlu0 %118
    %122 = vset.pattern.permute.xlu0 0
    %123 = vperm.xlu0 %122, %v73
    %v124 = vpop.permute.xlu0 %123
    %127 = vset.pattern.permute.xlu0 0
    %128 = vperm.xlu0 %127, %v74
    %v129 = vpop.permute.xlu0 %128
    %132 = vset.pattern.permute.xlu0 0
    %133 = vperm.xlu0 %132, %v75
    %v134 = vpop.permute.xlu0 %133
    %137 = vset.pattern.permute.xlu0 0
    %138 = vperm.xlu0 %137, %v76
    %v139 = vpop.permute.xlu0 %138
    %142 = vset.pattern.permute.xlu0 0
    %143 = vperm.xlu0 %142, %v77
    %v144 = vpop.permute.xlu0 %143
    %147 = vset.pattern.permute.xlu0 0
    %148 = vperm.xlu0 %147, %v78
    %v149 = vpop.permute.xlu0 %148
    %152 = vset.pattern.permute.xlu0 0
    %153 = vperm.xlu0 %152, %v79
    %v154 = vpop.permute.xlu0 %153
    %157 = vset.pattern.permute.xlu0 0
    %158 = vperm.xlu0 %157, %v80
    %v159 = vpop.permute.xlu0 %158
    %162 = vset.pattern.permute.xlu0 0
    %163 = vperm.xlu0 %162, %v81
    %v164 = vpop.permute.xlu0 %163
    %167 = vset.pattern.permute.xlu0 0
    %168 = vperm.xlu0 %167, %v82
    %v169 = vpop.permute.xlu0 %168
    %172 = vset.pattern.permute.xlu0 0
    %173 = vperm.xlu0 %172, %v83
    %v174 = vpop.permute.xlu0 %173
    %177 = vset.pattern.permute.xlu0 0
    %178 = vperm.xlu0 %177, %v84
    %v179 = vpop.permute.xlu0 %178
    %182 = vset.pattern.permute.xlu0 0
    %183 = vperm.xlu0 %182, %v85
    %v184 = vpop.permute.xlu0 %183
    %187 = vset.pattern.permute.xlu0 0
    %188 = vperm.xlu0 %187, %v86
    %v189 = vpop.permute.xlu0 %188
    %192 = vset.pattern.permute.xlu0 0
    %193 = vperm.xlu0 %192, %v87
    %v194 = vpop.permute.xlu0 %193
    %197 = vset.pattern.permute.xlu0 0
    %198 = vperm.xlu0 %197, %v88
    %v199 = vpop.permute.xlu0 %198
    %202 = vset.pattern.permute.xlu0 0
    %203 = vperm.xlu0 %202, %v89
    %v204 = vpop.permute.xlu0 %203
    %207 = vset.pattern.permute.xlu0 0
    %208 = vperm.xlu0 %207, %v90
    %v209 = vpop.permute.xlu0 %208
    %212 = vset.pattern.permute.xlu0 0
    %213 = vperm.xlu0 %212, %v91
    %v214 = vpop.permute.xlu0 %213
    %217 = vset.pattern.permute.xlu0 0
    %218 = vperm.xlu0 %217, %v92
    %v219 = vpop.permute.xlu0 %218
    %222 = vset.pattern.permute.xlu0 0
    %223 = vperm.xlu0 %222, %v93
    %v224 = vpop.permute.xlu0 %223
    %227 = vset.pattern.permute.xlu0 0
    %228 = vperm.xlu0 %227, %v94
    %v229 = vpop.permute.xlu0 %228
    %232 = vset.pattern.permute.xlu0 0
    %233 = vperm.xlu0 %232, %v95
    %v234 = vpop.permute.xlu0 %233
    %237 = vset.pattern.permute.xlu0 0
    %238 = vperm.xlu0 %237, %v96
    %v239 = vpop.permute.xlu0 %238
    %242 = vset.pattern.permute.xlu0 0
    %243 = vperm.xlu0 %242, %v97
    %v244 = vpop.permute.xlu0 %243
    %247 = vset.pattern.permute.xlu0 0
    %248 = vperm.xlu0 %247, %v98
    %v249 = vpop.permute.xlu0 %248
    %252 = vset.pattern.permute.xlu0 0
    %253 = vperm.xlu0 %252, %v99
    %v254 = vpop.permute.xlu0 %253
    %257 = vset.pattern.permute.xlu0 0
    %258 = vperm.xlu0 %257, %v100
    %v259 = vpop.permute.xlu0 %258
    %vm261 = vcmask 23552
    %v263 = vsel %vm261, %v36, 0
    %v266 = vsel %vm261, %v37, 0
    %v269 = vsel %vm261, %v38, 0
    %v272 = vsel %vm261, %v39, 0
    %v275 = vsel %vm261, %v40, 0
    %v278 = vsel %vm261, %v41, 0
    %v281 = vsel %vm261, %v42, 0
    %v284 = vsel %vm261, %v43, 0
    %v287 = vsel %vm261, %v44, 0
    %v290 = vsel %vm261, %v45, 0
    %v293 = vsel %vm261, %v46, 0
    %v296 = vsel %vm261, %v47, 0
    %v299 = vsel %vm261, %v48, 0
    %v302 = vsel %vm261, %v49, 0
    %v305 = vsel %vm261, %v50, 0
    %v308 = vsel %vm261, %v51, 0
    %v311 = vsel %vm261, %v52, 0
    %v314 = vsel %vm261, %v53, 0
    %v317 = vsel %vm261, %v54, 0
    %v320 = vsel %vm261, %v55, 0
    %v323 = vsel %vm261, %v56, 0
    %v326 = vsel %vm261, %v57, 0
    %v329 = vsel %vm261, %v58, 0
    %v332 = vsel %vm261, %v59, 0
    %v335 = vsel %vm261, %v60, 0
    %v338 = vsel %vm261, %v61, 0
    %v341 = vsel %vm261, %v62, 0
    %v344 = vsel %vm261, %v63, 0
    %v347 = vsel %vm261, %v64, 0
    %v350 = vsel %vm261, %v65, 0
    %v353 = vsel %vm261, %v66, 0
    %v356 = vsel %vm261, %v67, 0
    %vm358 = vcmask 1042432
    %v360 = vsel %vm358, %v68, 0
    %362 = vmatprep.subr.mxu0 0.0
    %363 = vmatpush1.msra.mxu0 0.0
    %364 = vmatprep.subr.mxu0 0.0
    %365 = vmatpush1.msra.mxu0 0.0
    %366 = vmatprep.subr.mxu0 0.0
    %367 = vmatpush1.msra.mxu0 0.0
    %368 = vmatprep.subr.mxu0 0.0
    %369 = vmatpush1.msra.mxu0 0.0
    %370 = vmatprep.subr.mxu0 0.0
    %371 = vmatpush1.msra.mxu0 0.0
    %372 = vmatprep.subr.mxu0 0.0
    %373 = vmatpush1.msra.mxu0 0.0
    %374 = vmatprep.subr.mxu0 0.0
    %375 = vmatpush1.msra.mxu0 0.0
    %376 = vmatprep.subr.mxu0 0.0
    %377 = vmatpush1.msra.mxu0 0.0
    %378 = vmatprep.subr.mxu0 0.0
    %379 = vmatpush1.msra.mxu0 0.0
    %380 = vmatprep.subr.mxu0 0.0
    %381 = vmatpush1.msra.mxu0 0.0
    %382 = vmatprep.subr.mxu0 0.0
    %383 = vmatpush1.msra.mxu0 0.0
    %384 = vmatprep.subr.mxu0 0.0
    %385 = vmatpush1.msra.mxu0 0.0
    %386 = vmatprep.subr.mxu0 0.0
    %387 = vmatpush1.msra.mxu0 0.0
    %388 = vmatprep.subr.mxu0 0.0
    %389 = vmatpush1.msra.mxu0 0.0
    %390 = vmatprep.subr.mxu0 0.0
    %391 = vmatpush1.msra.mxu0 0.0
    %392 = vmatprep.subr.mxu0 0.0
    %393 = vmatpush1.msra.mxu0 %v360
    %394 = vmatprep.subr.mxu0 0.0
    %395 = vmatpush2.msra.mxu0 0.0
    %396 = vmatprep.subr.mxu0 0.0
    %397 = vmatpush2.msra.mxu0 0.0
    %398 = vmatprep.subr.mxu0 0.0
    %399 = vmatpush2.msra.mxu0 0.0
    %400 = vmatprep.subr.mxu0 0.0
    %401 = vmatpush2.msra.mxu0 0.0
    %402 = vmatprep.subr.mxu0 0.0
    %403 = vmatpush2.msra.mxu0 0.0
    %404 = vmatprep.subr.mxu0 0.0
    %405 = vmatpush2.msra.mxu0 0.0
    %406 = vmatprep.subr.mxu0 0.0
    %407 = vmatpush2.msra.mxu0 0.0
    %408 = vmatprep.subr.mxu0 0.0
    %409 = vmatpush2.msra.mxu0 0.0
    %410 = vmatprep.subr.mxu0 0.0
    %411 = vmatpush2.msra.mxu0 0.0
    %412 = vmatprep.subr.mxu0 0.0
    %413 = vmatpush2.msra.mxu0 0.0
    %414 = vmatprep.subr.mxu0 0.0
    %415 = vmatpush2.msra.mxu0 0.0
    %416 = vmatprep.subr.mxu0 0.0
    %417 = vmatpush2.msra.mxu0 0.0
    %418 = vmatprep.subr.mxu0 0.0
    %419 = vmatpush2.msra.mxu0 0.0
    %420 = vmatprep.subr.mxu0 0.0
    %421 = vmatpush2.msra.mxu0 0.0
    %422 = vmatprep.subr.mxu0 0.0
    %423 = vmatpush2.msra.mxu0 0.0
    %424 = vmatprep.subr.mxu0 0.0
    %425 = vmatpush2.msra.mxu0 0.0
    %426 = vmatprep.mubr.f32.mxu0 0.0
    %427 = vmatmul.mubr.f32.gmra.mxu0 %v263
    %v428 = vpop.f32.mrf.mxu0
    %v429 = vadd.f32 %v104, %v428
    %v430 = vpop.f32.mrf.mxu0
    %431 = vmatprep.mubr.f32.mxu0 0.0
    %432 = vmatmul.mubr.f32.gmra.mxu0 %v266
    %v433 = vpop.f32.mrf.mxu0
    %v434 = vadd.f32 %v109, %v433
    %v435 = vpop.f32.mrf.mxu0
    %436 = vmatprep.mubr.f32.mxu0 0.0
    %437 = vmatmul.mubr.f32.gmra.mxu0 %v269
    %v438 = vpop.f32.mrf.mxu0
    %v439 = vadd.f32 %v114, %v438
    %v440 = vpop.f32.mrf.mxu0
    %441 = vmatprep.mubr.f32.mxu0 0.0
    %442 = vmatmul.mubr.f32.gmra.mxu0 %v272
    %v443 = vpop.f32.mrf.mxu0
    %v444 = vadd.f32 %v119, %v443
    %v445 = vpop.f32.mrf.mxu0
    %446 = vmatprep.mubr.f32.mxu0 0.0
    %447 = vmatmul.mubr.f32.gmra.mxu0 %v275
    %v448 = vpop.f32.mrf.mxu0
    %v449 = vadd.f32 %v124, %v448
    %v450 = vpop.f32.mrf.mxu0
    %451 = vmatprep.mubr.f32.mxu0 0.0
    %452 = vmatmul.mubr.f32.gmra.mxu0 %v278
    %v453 = vpop.f32.mrf.mxu0
    %v454 = vadd.f32 %v129, %v453
    %v455 = vpop.f32.mrf.mxu0
    %456 = vmatprep.mubr.f32.mxu0 0.0
    %457 = vmatmul.mubr.f32.gmra.mxu0 %v281
    %v458 = vpop.f32.mrf.mxu0
    %v459 = vadd.f32 %v134, %v458
    %v460 = vpop.f32.mrf.mxu0
    %461 = vmatprep.mubr.f32.mxu0 0.0
    %462 = vmatmul.mubr.f32.gmra.mxu0 %v284
    %v463 = vpop.f32.mrf.mxu0
    %v464 = vadd.f32 %v139, %v463
    %v465 = vpop.f32.mrf.mxu0
    %466 = vmatprep.mubr.f32.mxu0 0.0
    %467 = vmatmul.mubr.f32.gmra.mxu0 %v287
    %v468 = vpop.f32.mrf.mxu0
    %v469 = vadd.f32 %v144, %v468
    %v470 = vpop.f32.mrf.mxu0
    %471 = vmatprep.mubr.f32.mxu0 0.0
    %472 = vmatmul.mubr.f32.gmra.mxu0 %v290
    %v473 = vpop.f32.mrf.mxu0
    %v474 = vadd.f32 %v149, %v473
    %v475 = vpop.f32.mrf.mxu0
    %476 = vmatprep.mubr.f32.mxu0 0.0
    %477 = vmatmul.mubr.f32.gmra.mxu0 %v293
    %v478 = vpop.f32.mrf.mxu0
    %v479 = vadd.f32 %v154, %v478
    %v480 = vpop.f32.mrf.mxu0
    %481 = vmatprep.mubr.f32.mxu0 0.0
    %482 = vmatmul.mubr.f32.gmra.mxu0 %v296
    %v483 = vpop.f32.mrf.mxu0
    %v484 = vadd.f32 %v159, %v483
    %v485 = vpop.f32.mrf.mxu0
    %486 = vmatprep.mubr.f32.mxu0 0.0
    %487 = vmatmul.mubr.f32.gmra.mxu0 %v299
    %v488 = vpop.f32.mrf.mxu0
    %v489 = vadd.f32 %v164, %v488
    %v490 = vpop.f32.mrf.mxu0
    %491 = vmatprep.mubr.f32.mxu0 0.0
    %492 = vmatmul.mubr.f32.gmra.mxu0 %v302
    %v493 = vpop.f32.mrf.mxu0
    %v494 = vadd.f32 %v169, %v493
    %v495 = vpop.f32.mrf.mxu0
    %496 = vmatprep.mubr.f32.mxu0 0.0
    %497 = vmatmul.mubr.f32.gmra.mxu0 %v305
    %v498 = vpop.f32.mrf.mxu0
    %v499 = vadd.f32 %v174, %v498
    %v500 = vpop.f32.mrf.mxu0
    %501 = vmatprep.mubr.f32.mxu0 0.0
    %502 = vmatmul.mubr.f32.gmra.mxu0 %v308
    %v503 = vpop.f32.mrf.mxu0
    %v504 = vadd.f32 %v179, %v503
    %v505 = vpop.f32.mrf.mxu0
    %506 = vmatprep.mubr.f32.mxu0 0.0
    %507 = vmatmul.mubr.f32.gmra.mxu0 %v311
    %v508 = vpop.f32.mrf.mxu0
    %v509 = vadd.f32 %v184, %v508
    %v510 = vpop.f32.mrf.mxu0
    %511 = vmatprep.mubr.f32.mxu0 0.0
    %512 = vmatmul.mubr.f32.gmra.mxu0 %v314
    %v513 = vpop.f32.mrf.mxu0
    %v514 = vadd.f32 %v189, %v513
    %v515 = vpop.f32.mrf.mxu0
    %516 = vmatprep.mubr.f32.mxu0 0.0
    %517 = vmatmul.mubr.f32.gmra.mxu0 %v317
    %v518 = vpop.f32.mrf.mxu0
    %v519 = vadd.f32 %v194, %v518
    %v520 = vpop.f32.mrf.mxu0
    %521 = vmatprep.mubr.f32.mxu0 0.0
    %522 = vmatmul.mubr.f32.gmra.mxu0 %v320
    %v523 = vpop.f32.mrf.mxu0
    %v524 = vadd.f32 %v199, %v523
    %v525 = vpop.f32.mrf.mxu0
    %526 = vmatprep.mubr.f32.mxu0 0.0
    %527 = vmatmul.mubr.f32.gmra.mxu0 %v323
    %v528 = vpop.f32.mrf.mxu0
    %v529 = vadd.f32 %v204, %v528
    %v530 = vpop.f32.mrf.mxu0
    %531 = vmatprep.mubr.f32.mxu0 0.0
    %532 = vmatmul.mubr.f32.gmra.mxu0 %v326
    %v533 = vpop.f32.mrf.mxu0
    %v534 = vadd.f32 %v209, %v533
    %v535 = vpop.f32.mrf.mxu0
    %536 = vmatprep.mubr.f32.mxu0 0.0
    %537 = vmatmul.mubr.f32.gmra.mxu0 %v329
    %v538 = vpop.f32.mrf.mxu0
    %v539 = vadd.f32 %v214, %v538
    %v540 = vpop.f32.mrf.mxu0
    %541 = vmatprep.mubr.f32.mxu0 0.0
    %542 = vmatmul.mubr.f32.gmra.mxu0 %v332
    %v543 = vpop.f32.mrf.mxu0
    %v544 = vadd.f32 %v219, %v543
    %v545 = vpop.f32.mrf.mxu0
    %546 = vmatprep.mubr.f32.mxu0 0.0
    %547 = vmatmul.mubr.f32.gmra.mxu0 %v335
    %v548 = vpop.f32.mrf.mxu0
    %v549 = vadd.f32 %v224, %v548
    %v550 = vpop.f32.mrf.mxu0
    %551 = vmatprep.mubr.f32.mxu0 0.0
    %552 = vmatmul.mubr.f32.gmra.mxu0 %v338
    %v553 = vpop.f32.mrf.mxu0
    %v554 = vadd.f32 %v229, %v553
    %v555 = vpop.f32.mrf.mxu0
    %556 = vmatprep.mubr.f32.mxu0 0.0
    %557 = vmatmul.mubr.f32.gmra.mxu0 %v341
    %v558 = vpop.f32.mrf.mxu0
    %v559 = vadd.f32 %v234, %v558
    %v560 = vpop.f32.mrf.mxu0
    %561 = vmatprep.mubr.f32.mxu0 0.0
    %562 = vmatmul.mubr.f32.gmra.mxu0 %v344
    %v563 = vpop.f32.mrf.mxu0
    %v564 = vadd.f32 %v239, %v563
    %v565 = vpop.f32.mrf.mxu0
    %566 = vmatprep.mubr.f32.mxu0 0.0
    %567 = vmatmul.mubr.f32.gmra.mxu0 %v347
    %v568 = vpop.f32.mrf.mxu0
    %v569 = vadd.f32 %v244, %v568
    %v570 = vpop.f32.mrf.mxu0
    %571 = vmatprep.mubr.f32.mxu0 0.0
    %572 = vmatmul.mubr.f32.gmra.mxu0 %v350
    %v573 = vpop.f32.mrf.mxu0
    %v574 = vadd.f32 %v249, %v573
    %v575 = vpop.f32.mrf.mxu0
    %576 = vmatprep.mubr.f32.mxu0 0.0
    %577 = vmatmul.mubr.f32.gmra.mxu0 %v353
    %v578 = vpop.f32.mrf.mxu0
    %v579 = vadd.f32 %v254, %v578
    %v580 = vpop.f32.mrf.mxu0
    %581 = vmatprep.mubr.f32.mxu0 0.0
    %582 = vmatmul.mubr.f32.gmra.mxu0 %v356
    %v583 = vpop.f32.mrf.mxu0
    %v584 = vadd.f32 %v259, %v583
    %v585 = vpop.f32.mrf.mxu0
    %586 = vdwg.mxu0
    %v587 = vmax.f32 %v429, 0.0
    %v588 = vmax.f32 %v434, 0.0
    %v589 = vmax.f32 %v439, 0.0
    %v590 = vmax.f32 %v444, 0.0
    %v591 = vmax.f32 %v449, 0.0
    %v592 = vmax.f32 %v454, 0.0
    %v593 = vmax.f32 %v459, 0.0
    %v594 = vmax.f32 %v464, 0.0
    %v595 = vmax.f32 %v469, 0.0
    %v596 = vmax.f32 %v474, 0.0
    %v597 = vmax.f32 %v479, 0.0
    %v598 = vmax.f32 %v484, 0.0
    %v599 = vmax.f32 %v489, 0.0
    %v600 = vmax.f32 %v494, 0.0
    %v601 = vmax.f32 %v499, 0.0
    %v602 = vmax.f32 %v504, 0.0
    %v603 = vmax.f32 %v509, 0.0
    %v604 = vmax.f32 %v514, 0.0
    %v605 = vmax.f32 %v519, 0.0
    %v606 = vmax.f32 %v524, 0.0
    %v607 = vmax.f32 %v529, 0.0
    %v608 = vmax.f32 %v534, 0.0
    %v609 = vmax.f32 %v539, 0.0
    %v610 = vmax.f32 %v544, 0.0
    %v611 = vmax.f32 %v549, 0.0
    %v612 = vmax.f32 %v554, 0.0
    %v613 = vmax.f32 %v559, 0.0
    %v614 = vmax.f32 %v564, 0.0
    %v615 = vmax.f32 %v569, 0.0
    %v616 = vmax.f32 %v574, 0.0
    %v617 = vmax.f32 %v579, 0.0
    %v618 = vmax.f32 %v584, 0.0
    %v619 = vld [vmem:[%s3] sm:$0xff]
    %v620 = vld [vmem:[%s3 + $0x8] sm:$0xff]
    %v621 = vld [vmem:[%s3 + $0x10] sm:$0xff]
    %v622 = vld [vmem:[%s3 + $0x18] sm:$0xff]
    %v623 = vld [vmem:[%s3 + $0x20] sm:$0xff]
    %v624 = vld [vmem:[%s3 + $0x28] sm:$0xff]
    %v625 = vld [vmem:[%s3 + $0x30] sm:$0xff]
    %v626 = vld [vmem:[%s3 + $0x38] sm:$0xff]
    %v627 = vld [vmem:[%s3 + $0x40] sm:$0xff]
    %v628 = vld [vmem:[%s3 + $0x48] sm:$0xff]
    %v629 = vld [vmem:[%s3 + $0x50] sm:$0xff]
    %v630 = vld [vmem:[%s3 + $0x58] sm:$0xff]
    %v631 = vld [vmem:[%s3 + $0x60] sm:$0xff]
    %v632 = vld [vmem:[%s3 + $0x68] sm:$0xff]
    %v633 = vld [vmem:[%s3 + $0x70] sm:$0xff]
    %v634 = vld [vmem:[%s3 + $0x78] sm:$0xff]
    %v635 = vld [vmem:[%s3 + $0x80] sm:$0xff]
    %v636 = vld [vmem:[%s3 + $0x88] sm:$0xff]
    %v637 = vld [vmem:[%s3 + $0x90] sm:$0xff]
    %v638 = vld [vmem:[%s3 + $0x98] sm:$0xff]
    %v639 = vld [vmem:[%s3 + $0xa0] sm:$0xff]
    %v640 = vld [vmem:[%s3 + $0xa8] sm:$0xff]
    %v641 = vld [vmem:[%s3 + $0xb0] sm:$0xff]
    %v642 = vld [vmem:[%s3 + $0xb8] sm:$0xff]
    %v643 = vld [vmem:[%s3 + $0xc0] sm:$0xff]
    %v644 = vld [vmem:[%s3 + $0xc8] sm:$0xff]
    %v645 = vld [vmem:[%s3 + $0xd0] sm:$0xff]
    %v646 = vld [vmem:[%s3 + $0xd8] sm:$0xff]
    %v647 = vld [vmem:[%s3 + $0xe0] sm:$0xff]
    %v648 = vld [vmem:[%s3 + $0xe8] sm:$0xff]
    %v649 = vld [vmem:[%s3 + $0xf0] sm:$0xff]
    %v650 = vld [vmem:[%s3 + $0xf8] sm:$0xff]
    %v651 = vpack.c.bf16 %v588, %v587
    %v652 = vpack.c.bf16 %v590, %v589
    %v653 = vpack.c.bf16 %v592, %v591
    %v654 = vpack.c.bf16 %v594, %v593
    %v655 = vpack.c.bf16 %v596, %v595
    %v656 = vpack.c.bf16 %v598, %v597
    %v657 = vpack.c.bf16 %v600, %v599
    %v658 = vpack.c.bf16 %v602, %v601
    %v659 = vpack.c.bf16 %v604, %v603
    %v660 = vpack.c.bf16 %v606, %v605
    %v661 = vpack.c.bf16 %v608, %v607
    %v662 = vpack.c.bf16 %v610, %v609
    %v663 = vpack.c.bf16 %v612, %v611
    %v664 = vpack.c.bf16 %v614, %v613
    %v665 = vpack.c.bf16 %v616, %v615
    %v666 = vpack.c.bf16 %v618, %v617
    %v667 = vld [vmem:[%s4] sm:$0xff]
    %v668 = vld [vmem:[%s4 + $0x8] sm:$0xff]
    %v669 = vld [vmem:[%s4 + $0x10] sm:$0xff]
    %v670 = vld [vmem:[%s4 + $0x18] sm:$0xff]
    %v671 = vld [vmem:[%s4 + $0x20] sm:$0xff]
    %v672 = vld [vmem:[%s4 + $0x28] sm:$0xff]
    %v673 = vld [vmem:[%s4 + $0x30] sm:$0xff]
    %v674 = vld [vmem:[%s4 + $0x38] sm:$0xff]
    %v675 = vld [vmem:[%s4 + $0x40] sm:$0xff]
    %v676 = vld [vmem:[%s4 + $0x48] sm:$0xff]
    %v677 = vld [vmem:[%s4 + $0x50] sm:$0xff]
    %v678 = vld [vmem:[%s4 + $0x58] sm:$0xff]
    %v679 = vld [vmem:[%s4 + $0x60] sm:$0xff]
    %v680 = vld [vmem:[%s4 + $0x68] sm:$0xff]
    %v681 = vld [vmem:[%s4 + $0x70] sm:$0xff]
    %v682 = vld [vmem:[%s4 + $0x78] sm:$0xff]
    %v683 = vld [vmem:[%s4 + $0x80] sm:$0xff]
    %v684 = vld [vmem:[%s4 + $0x88] sm:$0xff]
    %v685 = vld [vmem:[%s4 + $0x90] sm:$0xff]
    %v686 = vld [vmem:[%s4 + $0x98] sm:$0xff]
    %v687 = vld [vmem:[%s4 + $0xa0] sm:$0xff]
    %v688 = vld [vmem:[%s4 + $0xa8] sm:$0xff]
    %v689 = vld [vmem:[%s4 + $0xb0] sm:$0xff]
    %v690 = vld [vmem:[%s4 + $0xb8] sm:$0xff]
    %v691 = vld [vmem:[%s4 + $0xc0] sm:$0xff]
    %v692 = vld [vmem:[%s4 + $0xc8] sm:$0xff]
    %v693 = vld [vmem:[%s4 + $0xd0] sm:$0xff]
    %v694 = vld [vmem:[%s4 + $0xd8] sm:$0xff]
    %v695 = vld [vmem:[%s4 + $0xe0] sm:$0xff]
    %v696 = vld [vmem:[%s4 + $0xe8] sm:$0xff]
    %v697 = vld [vmem:[%s4 + $0xf0] sm:$0xff]
    %v698 = vld [vmem:[%s4 + $0xf8] sm:$0xff]
    %700 = vset.pattern.permute.xlu0 0
    %701 = vperm.xlu0 %700, %v667
    %v702 = vpop.permute.xlu0 %701
    %705 = vset.pattern.permute.xlu0 0
    %706 = vperm.xlu0 %705, %v668
    %v707 = vpop.permute.xlu0 %706
    %710 = vset.pattern.permute.xlu0 0
    %711 = vperm.xlu0 %710, %v669
    %v712 = vpop.permute.xlu0 %711
    %715 = vset.pattern.permute.xlu0 0
    %716 = vperm.xlu0 %715, %v670
    %v717 = vpop.permute.xlu0 %716
    %720 = vset.pattern.permute.xlu0 0
    %721 = vperm.xlu0 %720, %v671
    %v722 = vpop.permute.xlu0 %721
    %725 = vset.pattern.permute.xlu0 0
    %726 = vperm.xlu0 %725, %v672
    %v727 = vpop.permute.xlu0 %726
    %730 = vset.pattern.permute.xlu0 0
    %731 = vperm.xlu0 %730, %v673
    %v732 = vpop.permute.xlu0 %731
    %735 = vset.pattern.permute.xlu0 0
    %736 = vperm.xlu0 %735, %v674
    %v737 = vpop.permute.xlu0 %736
    %740 = vset.pattern.permute.xlu0 0
    %741 = vperm.xlu0 %740, %v675
    %v742 = vpop.permute.xlu0 %741
    %745 = vset.pattern.permute.xlu0 0
    %746 = vperm.xlu0 %745, %v676
    %v747 = vpop.permute.xlu0 %746
    %750 = vset.pattern.permute.xlu0 0
    %751 = vperm.xlu0 %750, %v677
    %v752 = vpop.permute.xlu0 %751
    %755 = vset.pattern.permute.xlu0 0
    %756 = vperm.xlu0 %755, %v678
    %v757 = vpop.permute.xlu0 %756
    %760 = vset.pattern.permute.xlu0 0
    %761 = vperm.xlu0 %760, %v679
    %v762 = vpop.permute.xlu0 %761
    %765 = vset.pattern.permute.xlu0 0
    %766 = vperm.xlu0 %765, %v680
    %v767 = vpop.permute.xlu0 %766
    %770 = vset.pattern.permute.xlu0 0
    %771 = vperm.xlu0 %770, %v681
    %v772 = vpop.permute.xlu0 %771
    %775 = vset.pattern.permute.xlu0 0
    %776 = vperm.xlu0 %775, %v682
    %v777 = vpop.permute.xlu0 %776
    %780 = vset.pattern.permute.xlu0 0
    %781 = vperm.xlu0 %780, %v683
    %v782 = vpop.permute.xlu0 %781
    %785 = vset.pattern.permute.xlu0 0
    %786 = vperm.xlu0 %785, %v684
    %v787 = vpop.permute.xlu0 %786
    %790 = vset.pattern.permute.xlu0 0
    %791 = vperm.xlu0 %790, %v685
    %v792 = vpop.permute.xlu0 %791
    %795 = vset.pattern.permute.xlu0 0
    %796 = vperm.xlu0 %795, %v686
    %v797 = vpop.permute.xlu0 %796
    %800 = vset.pattern.permute.xlu0 0
    %801 = vperm.xlu0 %800, %v687
    %v802 = vpop.permute.xlu0 %801
    %805 = vset.pattern.permute.xlu0 0
    %806 = vperm.xlu0 %805, %v688
    %v807 = vpop.permute.xlu0 %806
    %810 = vset.pattern.permute.xlu0 0
    %811 = vperm.xlu0 %810, %v689
    %v812 = vpop.permute.xlu0 %811
    %815 = vset.pattern.permute.xlu0 0
    %816 = vperm.xlu0 %815, %v690
    %v817 = vpop.permute.xlu0 %816
    %820 = vset.pattern.permute.xlu0 0
    %821 = vperm.xlu0 %820, %v691
    %v822 = vpop.permute.xlu0 %821
    %825 = vset.pattern.permute.xlu0 0
    %826 = vperm.xlu0 %825, %v692
    %v827 = vpop.permute.xlu0 %826
    %830 = vset.pattern.permute.xlu0 0
    %831 = vperm.xlu0 %830, %v693
    %v832 = vpop.permute.xlu0 %831
    %835 = vset.pattern.permute.xlu0 0
    %836 = vperm.xlu0 %835, %v694
    %v837 = vpop.permute.xlu0 %836
    %840 = vset.pattern.permute.xlu0 0
    %841 = vperm.xlu0 %840, %v695
    %v842 = vpop.permute.xlu0 %841
    %845 = vset.pattern.permute.xlu0 0
    %846 = vperm.xlu0 %845, %v696
    %v847 = vpop.permute.xlu0 %846
    %850 = vset.pattern.permute.xlu0 0
    %851 = vperm.xlu0 %850, %v697
    %v852 = vpop.permute.xlu0 %851
    %855 = vset.pattern.permute.xlu0 0
    %856 = vperm.xlu0 %855, %v698
    %v857 = vpop.permute.xlu0 %856
    %v891 = vunpack.c.l.b16 %v619
    %v892 = vunpack.c.h.b16 %v619
    %v893 = vunpack.c.l.b16 %v620
    %v894 = vunpack.c.h.b16 %v620
    %v895 = vunpack.c.l.b16 %v621
    %v896 = vunpack.c.h.b16 %v621
    %v897 = vunpack.c.l.b16 %v622
    %v898 = vunpack.c.h.b16 %v622
    %v899 = vunpack.c.l.b16 %v623
    %v900 = vunpack.c.h.b16 %v623
    %v901 = vunpack.c.l.b16 %v624
    %v902 = vunpack.c.h.b16 %v624
    %v903 = vunpack.c.l.b16 %v625
    %v904 = vunpack.c.h.b16 %v625
    %v905 = vunpack.c.l.b16 %v626
    %v906 = vunpack.c.h.b16 %v626
    %v907 = vunpack.c.l.b16 %v627
    %v908 = vunpack.c.h.b16 %v627
    %v909 = vunpack.c.l.b16 %v628
    %v910 = vunpack.c.h.b16 %v628
    %v911 = vunpack.c.l.b16 %v629
    %v912 = vunpack.c.h.b16 %v629
    %v913 = vunpack.c.l.b16 %v630
    %v914 = vunpack.c.h.b16 %v630
    %v915 = vunpack.c.l.b16 %v631
    %v916 = vunpack.c.h.b16 %v631
    %v917 = vunpack.c.l.b16 %v632
    %v918 = vunpack.c.h.b16 %v632
    %v919 = vunpack.c.l.b16 %v633
    %v920 = vunpack.c.h.b16 %v633
    %v921 = vunpack.c.l.b16 %v634
    %v922 = vunpack.c.h.b16 %v634
    %v923 = vunpack.c.l.b16 %v635
    %v924 = vunpack.c.h.b16 %v635
    %v925 = vunpack.c.l.b16 %v636
    %v926 = vunpack.c.h.b16 %v636
    %v927 = vunpack.c.l.b16 %v637
    %v928 = vunpack.c.h.b16 %v637
    %v929 = vunpack.c.l.b16 %v638
    %v930 = vunpack.c.h.b16 %v638
    %v931 = vunpack.c.l.b16 %v639
    %v932 = vunpack.c.h.b16 %v639
    %v933 = vunpack.c.l.b16 %v640
    %v934 = vunpack.c.h.b16 %v640
    %v935 = vunpack.c.l.b16 %v641
    %v936 = vunpack.c.h.b16 %v641
    %v937 = vunpack.c.l.b16 %v642
    %v938 = vunpack.c.h.b16 %v642
    %v939 = vunpack.c.l.b16 %v643
    %v940 = vunpack.c.h.b16 %v643
    %v941 = vunpack.c.l.b16 %v644
    %v942 = vunpack.c.h.b16 %v644
    %v943 = vunpack.c.l.b16 %v645
    %v944 = vunpack.c.h.b16 %v645
    %v945 = vunpack.c.l.b16 %v646
    %v946 = vunpack.c.h.b16 %v646
    %v947 = vunpack.c.l.b16 %v647
    %v948 = vunpack.c.h.b16 %v647
    %v949 = vunpack.c.l.b16 %v648
    %v950 = vunpack.c.h.b16 %v648
    %v951 = vunpack.c.l.b16 %v649
    %v952 = vunpack.c.h.b16 %v649
    %v953 = vunpack.c.l.b16 %v650
    %v954 = vunpack.c.h.b16 %v650
    %v955 = vpack.c.b16 %v893, %v891
    %v956 = vpack.c.b16 %v894, %v892
    %v957 = vpack.c.b16 %v897, %v895
    %v958 = vpack.c.b16 %v898, %v896
    %v959 = vpack.c.b16 %v901, %v899
    %v960 = vpack.c.b16 %v902, %v900
    %v961 = vpack.c.b16 %v905, %v903
    %v962 = vpack.c.b16 %v906, %v904
    %v963 = vpack.c.b16 %v909, %v907
    %v964 = vpack.c.b16 %v910, %v908
    %v965 = vpack.c.b16 %v913, %v911
    %v966 = vpack.c.b16 %v914, %v912
    %v967 = vpack.c.b16 %v917, %v915
    %v968 = vpack.c.b16 %v918, %v916
    %v969 = vpack.c.b16 %v921, %v919
    %v970 = vpack.c.b16 %v922, %v920
    %v971 = vpack.c.b16 %v925, %v923
    %v972 = vpack.c.b16 %v926, %v924
    %v973 = vpack.c.b16 %v929, %v927
    %v974 = vpack.c.b16 %v930, %v928
    %v975 = vpack.c.b16 %v933, %v931
    %v976 = vpack.c.b16 %v934, %v932
    %v977 = vpack.c.b16 %v937, %v935
    %v978 = vpack.c.b16 %v938, %v936
    %v979 = vpack.c.b16 %v941, %v939
    %v980 = vpack.c.b16 %v942, %v940
    %v981 = vpack.c.b16 %v945, %v943
    %v982 = vpack.c.b16 %v946, %v944
    %v983 = vpack.c.b16 %v949, %v947
    %v984 = vpack.c.b16 %v950, %v948
    %v985 = vpack.c.b16 %v953, %v951
    %v986 = vpack.c.b16 %v954, %v952
    %1019 = vmatprep.subr.bf16.mxu0 0
    %1020 = vmatpush1.bf16.msra.mxu0 %v658
    %1021 = vmatprep.subr.bf16.mxu0 0
    %1022 = vmatpush1.bf16.msra.mxu0 %v657
    %1023 = vmatprep.subr.bf16.mxu0 0
    %1024 = vmatpush1.bf16.msra.mxu0 %v656
    %1025 = vmatprep.subr.bf16.mxu0 0
    %1026 = vmatpush1.bf16.msra.mxu0 %v655
    %1027 = vmatprep.subr.bf16.mxu0 0
    %1028 = vmatpush1.bf16.msra.mxu0 %v654
    %1029 = vmatprep.subr.bf16.mxu0 0
    %1030 = vmatpush1.bf16.msra.mxu0 %v653
    %1031 = vmatprep.subr.bf16.mxu0 0
    %1032 = vmatpush1.bf16.msra.mxu0 %v652
    %1033 = vmatprep.subr.bf16.mxu0 0
    %1034 = vmatpush1.bf16.msra.mxu0 %v651
    %1035 = vmatprep.subr.bf16.mxu0 0
    %1036 = vmatpush2.bf16.msra.mxu0 %v666
    %1037 = vmatprep.subr.bf16.mxu0 0
    %1038 = vmatpush2.bf16.msra.mxu0 %v665
    %1039 = vmatprep.subr.bf16.mxu0 0
    %1040 = vmatpush2.bf16.msra.mxu0 %v664
    %1041 = vmatprep.subr.bf16.mxu0 0
    %1042 = vmatpush2.bf16.msra.mxu0 %v663
    %1043 = vmatprep.subr.bf16.mxu0 0
    %1044 = vmatpush2.bf16.msra.mxu0 %v662
    %1045 = vmatprep.subr.bf16.mxu0 0
    %1046 = vmatpush2.bf16.msra.mxu0 %v661
    %1047 = vmatprep.subr.bf16.mxu0 0
    %1048 = vmatpush2.bf16.msra.mxu0 %v660
    %1049 = vmatprep.subr.bf16.mxu0 0
    %1050 = vmatpush2.bf16.msra.mxu0 %v659
    %1051 = vmatprep.mubr.bf16.mxu0 %v956
    %1052 = vmatmul.mubr.bf16.gmra.mxu0 %v955
    %v1053 = vpop.f32.mrf.mxu0
    %v1054 = vadd.f32 %v702, %v1053
    %v1055 = vpop.f32.mrf.mxu0
    %v1056 = vpop.f32.mrf.mxu0
    %v1057 = vadd.f32 %v707, %v1056
    %v1058 = vpop.f32.mrf.mxu0
    %1059 = vmatprep.mubr.bf16.mxu0 %v958
    %1060 = vmatmul.mubr.bf16.gmra.mxu0 %v957
    %v1061 = vpop.f32.mrf.mxu0
    %v1062 = vadd.f32 %v712, %v1061
    %v1063 = vpop.f32.mrf.mxu0
    %v1064 = vpop.f32.mrf.mxu0
    %v1065 = vadd.f32 %v717, %v1064
    %v1066 = vpop.f32.mrf.mxu0
    %1067 = vmatprep.mubr.bf16.mxu0 %v960
    %1068 = vmatmul.mubr.bf16.gmra.mxu0 %v959
    %v1069 = vpop.f32.mrf.mxu0
    %v1070 = vadd.f32 %v722, %v1069
    %v1071 = vpop.f32.mrf.mxu0
    %v1072 = vpop.f32.mrf.mxu0
    %v1073 = vadd.f32 %v727, %v1072
    %v1074 = vpop.f32.mrf.mxu0
    %1075 = vmatprep.mubr.bf16.mxu0 %v962
    %1076 = vmatmul.mubr.bf16.gmra.mxu0 %v961
    %v1077 = vpop.f32.mrf.mxu0
    %v1078 = vadd.f32 %v732, %v1077
    %v1079 = vpop.f32.mrf.mxu0
    %v1080 = vpop.f32.mrf.mxu0
    %v1081 = vadd.f32 %v737, %v1080
    %v1082 = vpop.f32.mrf.mxu0
    %1083 = vmatprep.mubr.bf16.mxu0 %v964
    %1084 = vmatmul.mubr.bf16.gmra.mxu0 %v963
    %v1085 = vpop.f32.mrf.mxu0
    %v1086 = vadd.f32 %v742, %v1085
    %v1087 = vpop.f32.mrf.mxu0
    %v1088 = vpop.f32.mrf.mxu0
    %v1089 = vadd.f32 %v747, %v1088
    %v1090 = vpop.f32.mrf.mxu0
    %1091 = vmatprep.mubr.bf16.mxu0 %v966
    %1092 = vmatmul.mubr.bf16.gmra.mxu0 %v965
    %v1093 = vpop.f32.mrf.mxu0
    %v1094 = vadd.f32 %v752, %v1093
    %v1095 = vpop.f32.mrf.mxu0
    %v1096 = vpop.f32.mrf.mxu0
    %v1097 = vadd.f32 %v757, %v1096
    %v1098 = vpop.f32.mrf.mxu0
    %1099 = vmatprep.mubr.bf16.mxu0 %v968
    %1100 = vmatmul.mubr.bf16.gmra.mxu0 %v967
    %v1101 = vpop.f32.mrf.mxu0
    %v1102 = vadd.f32 %v762, %v1101
    %v1103 = vpop.f32.mrf.mxu0
    %v1104 = vpop.f32.mrf.mxu0
    %v1105 = vadd.f32 %v767, %v1104
    %v1106 = vpop.f32.mrf.mxu0
    %1107 = vmatprep.mubr.bf16.mxu0 %v970
    %1108 = vmatmul.mubr.bf16.gmra.mxu0 %v969
    %v1109 = vpop.f32.mrf.mxu0
    %v1110 = vadd.f32 %v772, %v1109
    %v1111 = vpop.f32.mrf.mxu0
    %v1112 = vpop.f32.mrf.mxu0
    %v1113 = vadd.f32 %v777, %v1112
    %v1114 = vpop.f32.mrf.mxu0
    %1115 = vmatprep.mubr.bf16.mxu0 %v972
    %1116 = vmatmul.mubr.bf16.gmra.mxu0 %v971
    %v1117 = vpop.f32.mrf.mxu0
    %v1118 = vadd.f32 %v782, %v1117
    %v1119 = vpop.f32.mrf.mxu0
    %v1120 = vpop.f32.mrf.mxu0
    %v1121 = vadd.f32 %v787, %v1120
    %v1122 = vpop.f32.mrf.mxu0
    %1123 = vmatprep.mubr.bf16.mxu0 %v974
    %1124 = vmatmul.mubr.bf16.gmra.mxu0 %v973
    %v1125 = vpop.f32.mrf.mxu0
    %v1126 = vadd.f32 %v792, %v1125
    %v1127 = vpop.f32.mrf.mxu0
    %v1128 = vpop.f32.mrf.mxu0
    %v1129 = vadd.f32 %v797, %v1128
    %v1130 = vpop.f32.mrf.mxu0
    %1131 = vmatprep.mubr.bf16.mxu0 %v976
    %1132 = vmatmul.mubr.bf16.gmra.mxu0 %v975
    %v1133 = vpop.f32.mrf.mxu0
    %v1134 = vadd.f32 %v802, %v1133
    %v1135 = vpop.f32.mrf.mxu0
    %v1136 = vpop.f32.mrf.mxu0
    %v1137 = vadd.f32 %v807, %v1136
    %v1138 = vpop.f32.mrf.mxu0
    %1139 = vmatprep.mubr.bf16.mxu0 %v978
    %1140 = vmatmul.mubr.bf16.gmra.mxu0 %v977
    %v1141 = vpop.f32.mrf.mxu0
    %v1142 = vadd.f32 %v812, %v1141
    %v1143 = vpop.f32.mrf.mxu0
    %v1144 = vpop.f32.mrf.mxu0
    %v1145 = vadd.f32 %v817, %v1144
    %v1146 = vpop.f32.mrf.mxu0
    %1147 = vmatprep.mubr.bf16.mxu0 %v980
    %1148 = vmatmul.mubr.bf16.gmra.mxu0 %v979
    %v1149 = vpop.f32.mrf.mxu0
    %v1150 = vadd.f32 %v822, %v1149
    %v1151 = vpop.f32.mrf.mxu0
    %v1152 = vpop.f32.mrf.mxu0
    %v1153 = vadd.f32 %v827, %v1152
    %v1154 = vpop.f32.mrf.mxu0
    %1155 = vmatprep.mubr.bf16.mxu0 %v982
    %1156 = vmatmul.mubr.bf16.gmra.mxu0 %v981
    %v1157 = vpop.f32.mrf.mxu0
    %v1158 = vadd.f32 %v832, %v1157
    %v1159 = vpop.f32.mrf.mxu0
    %v1160 = vpop.f32.mrf.mxu0
    %v1161 = vadd.f32 %v837, %v1160
    %v1162 = vpop.f32.mrf.mxu0
    %1163 = vmatprep.mubr.bf16.mxu0 %v984
    %1164 = vmatmul.mubr.bf16.gmra.mxu0 %v983
    %v1165 = vpop.f32.mrf.mxu0
    %v1166 = vadd.f32 %v842, %v1165
    %v1167 = vpop.f32.mrf.mxu0
    %v1168 = vpop.f32.mrf.mxu0
    %v1169 = vadd.f32 %v847, %v1168
    %v1170 = vpop.f32.mrf.mxu0
    %1171 = vmatprep.mubr.bf16.mxu0 %v986
    %1172 = vmatmul.mubr.bf16.gmra.mxu0 %v985
    %v1173 = vpop.f32.mrf.mxu0
    %v1174 = vadd.f32 %v852, %v1173
    %v1175 = vpop.f32.mrf.mxu0
    %v1176 = vpop.f32.mrf.mxu0
    %v1177 = vadd.f32 %v857, %v1176
    %v1178 = vpop.f32.mrf.mxu0
    %1179 = vdwg.mxu0
    %v1180 = vmax.f32 %v1054, 0.0
    %v1181 = vmax.f32 %v1057, 0.0
    %v1182 = vmax.f32 %v1062, 0.0
    %v1183 = vmax.f32 %v1065, 0.0
    %v1184 = vmax.f32 %v1070, 0.0
    %v1185 = vmax.f32 %v1073, 0.0
    %v1186 = vmax.f32 %v1078, 0.0
    %v1187 = vmax.f32 %v1081, 0.0
    %v1188 = vmax.f32 %v1086, 0.0
    %v1189 = vmax.f32 %v1089, 0.0
    %v1190 = vmax.f32 %v1094, 0.0
    %v1191 = vmax.f32 %v1097, 0.0
    %v1192 = vmax.f32 %v1102, 0.0
    %v1193 = vmax.f32 %v1105, 0.0
    %v1194 = vmax.f32 %v1110, 0.0
    %v1195 = vmax.f32 %v1113, 0.0
    %v1196 = vmax.f32 %v1118, 0.0
    %v1197 = vmax.f32 %v1121, 0.0
    %v1198 = vmax.f32 %v1126, 0.0
    %v1199 = vmax.f32 %v1129, 0.0
    %v1200 = vmax.f32 %v1134, 0.0
    %v1201 = vmax.f32 %v1137, 0.0
    %v1202 = vmax.f32 %v1142, 0.0
    %v1203 = vmax.f32 %v1145, 0.0
    %v1204 = vmax.f32 %v1150, 0.0
    %v1205 = vmax.f32 %v1153, 0.0
    %v1206 = vmax.f32 %v1158, 0.0
    %v1207 = vmax.f32 %v1161, 0.0
    %v1208 = vmax.f32 %v1166, 0.0
    %v1209 = vmax.f32 %v1169, 0.0
    %v1210 = vmax.f32 %v1174, 0.0
    %v1211 = vmax.f32 %v1177, 0.0
    %v1212 = vld [vmem:[%s5] sm:$0xff]
    %v1213 = vld [vmem:[%s5 + $0x8] sm:$0xff]
    %v1214 = vld [vmem:[%s5 + $0x10] sm:$0xff]
    %v1215 = vld [vmem:[%s5 + $0x18] sm:$0xff]
    %v1216 = vld [vmem:[%s5 + $0x20] sm:$0xff]
    %v1217 = vld [vmem:[%s5 + $0x28] sm:$0xff]
    %v1218 = vld [vmem:[%s5 + $0x30] sm:$0xff]
    %v1219 = vld [vmem:[%s5 + $0x38] sm:$0xff]
    %v1220 = vld [vmem:[%s5 + $0x40] sm:$0xff]
    %v1221 = vld [vmem:[%s5 + $0x48] sm:$0xff]
    %v1222 = vld [vmem:[%s5 + $0x50] sm:$0xff]
    %v1223 = vld [vmem:[%s5 + $0x58] sm:$0xff]
    %v1224 = vld [vmem:[%s5 + $0x60] sm:$0xff]
    %v1225 = vld [vmem:[%s5 + $0x68] sm:$0xff]
    %v1226 = vld [vmem:[%s5 + $0x70] sm:$0xff]
    %v1227 = vld [vmem:[%s5 + $0x78] sm:$0xff]
    %v1228 = vld [vmem:[%s5 + $0x80] sm:$0xff]
    %v1229 = vld [vmem:[%s5 + $0x88] sm:$0xff]
    %v1230 = vld [vmem:[%s5 + $0x90] sm:$0xff]
    %v1231 = vld [vmem:[%s5 + $0x98] sm:$0xff]
    %v1232 = vld [vmem:[%s5 + $0xa0] sm:$0xff]
    %v1233 = vld [vmem:[%s5 + $0xa8] sm:$0xff]
    %v1234 = vld [vmem:[%s5 + $0xb0] sm:$0xff]
    %v1235 = vld [vmem:[%s5 + $0xb8] sm:$0xff]
    %v1236 = vld [vmem:[%s5 + $0xc0] sm:$0xff]
    %v1237 = vld [vmem:[%s5 + $0xc8] sm:$0xff]
    %v1238 = vld [vmem:[%s5 + $0xd0] sm:$0xff]
    %v1239 = vld [vmem:[%s5 + $0xd8] sm:$0xff]
    %v1240 = vld [vmem:[%s5 + $0xe0] sm:$0xff]
    %v1241 = vld [vmem:[%s5 + $0xe8] sm:$0xff]
    %v1242 = vld [vmem:[%s5 + $0xf0] sm:$0xff]
    %v1243 = vld [vmem:[%s5 + $0xf8] sm:$0xff]
    %v1244 = vpack.c.bf16 %v1181, %v1180
    %v1245 = vpack.c.bf16 %v1183, %v1182
    %v1246 = vpack.c.bf16 %v1185, %v1184
    %v1247 = vpack.c.bf16 %v1187, %v1186
    %v1248 = vpack.c.bf16 %v1189, %v1188
    %v1249 = vpack.c.bf16 %v1191, %v1190
    %v1250 = vpack.c.bf16 %v1193, %v1192
    %v1251 = vpack.c.bf16 %v1195, %v1194
    %v1252 = vpack.c.bf16 %v1197, %v1196
    %v1253 = vpack.c.bf16 %v1199, %v1198
    %v1254 = vpack.c.bf16 %v1201, %v1200
    %v1255 = vpack.c.bf16 %v1203, %v1202
    %v1256 = vpack.c.bf16 %v1205, %v1204
    %v1257 = vpack.c.bf16 %v1207, %v1206
    %v1258 = vpack.c.bf16 %v1209, %v1208
    %v1259 = vpack.c.bf16 %v1211, %v1210
    %v1260 = vld [vmem:[%s6] sm:$0xff]
    %v1261 = vld [vmem:[%s6 + $0x8] sm:$0xff]
    %v1262 = vld [vmem:[%s6 + $0x10] sm:$0xff]
    %v1263 = vld [vmem:[%s6 + $0x18] sm:$0xff]
    %v1264 = vld [vmem:[%s6 + $0x20] sm:$0xff]
    %v1265 = vld [vmem:[%s6 + $0x28] sm:$0xff]
    %v1266 = vld [vmem:[%s6 + $0x30] sm:$0xff]
    %v1267 = vld [vmem:[%s6 + $0x38] sm:$0xff]
    %v1268 = vld [vmem:[%s6 + $0x40] sm:$0xff]
    %v1269 = vld [vmem:[%s6 + $0x48] sm:$0xff]
    %v1270 = vld [vmem:[%s6 + $0x50] sm:$0xff]
    %v1271 = vld [vmem:[%s6 + $0x58] sm:$0xff]
    %v1272 = vld [vmem:[%s6 + $0x60] sm:$0xff]
    %v1273 = vld [vmem:[%s6 + $0x68] sm:$0xff]
    %v1274 = vld [vmem:[%s6 + $0x70] sm:$0xff]
    %v1275 = vld [vmem:[%s6 + $0x78] sm:$0xff]
    %v1276 = vld [vmem:[%s6 + $0x80] sm:$0xff]
    %v1277 = vld [vmem:[%s6 + $0x88] sm:$0xff]
    %v1278 = vld [vmem:[%s6 + $0x90] sm:$0xff]
    %v1279 = vld [vmem:[%s6 + $0x98] sm:$0xff]
    %v1280 = vld [vmem:[%s6 + $0xa0] sm:$0xff]
    %v1281 = vld [vmem:[%s6 + $0xa8] sm:$0xff]
    %v1282 = vld [vmem:[%s6 + $0xb0] sm:$0xff]
    %v1283 = vld [vmem:[%s6 + $0xb8] sm:$0xff]
    %v1284 = vld [vmem:[%s6 + $0xc0] sm:$0xff]
    %v1285 = vld [vmem:[%s6 + $0xc8] sm:$0xff]
    %v1286 = vld [vmem:[%s6 + $0xd0] sm:$0xff]
    %v1287 = vld [vmem:[%s6 + $0xd8] sm:$0xff]
    %v1288 = vld [vmem:[%s6 + $0xe0] sm:$0xff]
    %v1289 = vld [vmem:[%s6 + $0xe8] sm:$0xff]
    %v1290 = vld [vmem:[%s6 + $0xf0] sm:$0xff]
    %v1291 = vld [vmem:[%s6 + $0xf8] sm:$0xff]
    %1293 = vset.pattern.permute.xlu0 0
    %1294 = vperm.xlu0 %1293, %v1260
    %v1295 = vpop.permute.xlu0 %1294
    %1298 = vset.pattern.permute.xlu0 0
    %1299 = vperm.xlu0 %1298, %v1261
    %v1300 = vpop.permute.xlu0 %1299
    %1303 = vset.pattern.permute.xlu0 0
    %1304 = vperm.xlu0 %1303, %v1262
    %v1305 = vpop.permute.xlu0 %1304
    %1308 = vset.pattern.permute.xlu0 0
    %1309 = vperm.xlu0 %1308, %v1263
    %v1310 = vpop.permute.xlu0 %1309
    %1313 = vset.pattern.permute.xlu0 0
    %1314 = vperm.xlu0 %1313, %v1264
    %v1315 = vpop.permute.xlu0 %1314
    %1318 = vset.pattern.permute.xlu0 0
    %1319 = vperm.xlu0 %1318, %v1265
    %v1320 = vpop.permute.xlu0 %1319
    %1323 = vset.pattern.permute.xlu0 0
    %1324 = vperm.xlu0 %1323, %v1266
    %v1325 = vpop.permute.xlu0 %1324
    %1328 = vset.pattern.permute.xlu0 0
    %1329 = vperm.xlu0 %1328, %v1267
    %v1330 = vpop.permute.xlu0 %1329
    %1333 = vset.pattern.permute.xlu0 0
    %1334 = vperm.xlu0 %1333, %v1268
    %v1335 = vpop.permute.xlu0 %1334
    %1338 = vset.pattern.permute.xlu0 0
    %1339 = vperm.xlu0 %1338, %v1269
    %v1340 = vpop.permute.xlu0 %1339
    %1343 = vset.pattern.permute.xlu0 0
    %1344 = vperm.xlu0 %1343, %v1270
    %v1345 = vpop.permute.xlu0 %1344
    %1348 = vset.pattern.permute.xlu0 0
    %1349 = vperm.xlu0 %1348, %v1271
    %v1350 = vpop.permute.xlu0 %1349
    %1353 = vset.pattern.permute.xlu0 0
    %1354 = vperm.xlu0 %1353, %v1272
    %v1355 = vpop.permute.xlu0 %1354
    %1358 = vset.pattern.permute.xlu0 0
    %1359 = vperm.xlu0 %1358, %v1273
    %v1360 = vpop.permute.xlu0 %1359
    %1363 = vset.pattern.permute.xlu0 0
    %1364 = vperm.xlu0 %1363, %v1274
    %v1365 = vpop.permute.xlu0 %1364
    %1368 = vset.pattern.permute.xlu0 0
    %1369 = vperm.xlu0 %1368, %v1275
    %v1370 = vpop.permute.xlu0 %1369
    %1373 = vset.pattern.permute.xlu0 0
    %1374 = vperm.xlu0 %1373, %v1276
    %v1375 = vpop.permute.xlu0 %1374
    %1378 = vset.pattern.permute.xlu0 0
    %1379 = vperm.xlu0 %1378, %v1277
    %v1380 = vpop.permute.xlu0 %1379
    %1383 = vset.pattern.permute.xlu0 0
    %1384 = vperm.xlu0 %1383, %v1278
    %v1385 = vpop.permute.xlu0 %1384
    %1388 = vset.pattern.permute.xlu0 0
    %1389 = vperm.xlu0 %1388, %v1279
    %v1390 = vpop.permute.xlu0 %1389
    %1393 = vset.pattern.permute.xlu0 0
    %1394 = vperm.xlu0 %1393, %v1280
    %v1395 = vpop.permute.xlu0 %1394
    %1398 = vset.pattern.permute.xlu0 0
    %1399 = vperm.xlu0 %1398, %v1281
    %v1400 = vpop.permute.xlu0 %1399
    %1403 = vset.pattern.permute.xlu0 0
    %1404 = vperm.xlu0 %1403, %v1282
    %v1405 = vpop.permute.xlu0 %1404
    %1408 = vset.pattern.permute.xlu0 0
    %1409 = vperm.xlu0 %1408, %v1283
    %v1410 = vpop.permute.xlu0 %1409
    %1413 = vset.pattern.permute.xlu0 0
    %1414 = vperm.xlu0 %1413, %v1284
    %v1415 = vpop.permute.xlu0 %1414
    %1418 = vset.pattern.permute.xlu0 0
    %1419 = vperm.xlu0 %1418, %v1285
    %v1420 = vpop.permute.xlu0 %1419
    %1423 = vset.pattern.permute.xlu0 0
    %1424 = vperm.xlu0 %1423, %v1286
    %v1425 = vpop.permute.xlu0 %1424
    %1428 = vset.pattern.permute.xlu0 0
    %1429 = vperm.xlu0 %1428, %v1287
    %v1430 = vpop.permute.xlu0 %1429
    %1433 = vset.pattern.permute.xlu0 0
    %1434 = vperm.xlu0 %1433, %v1288
    %v1435 = vpop.permute.xlu0 %1434
    %1438 = vset.pattern.permute.xlu0 0
    %1439 = vperm.xlu0 %1438, %v1289
    %v1440 = vpop.permute.xlu0 %1439
    %1443 = vset.pattern.permute.xlu0 0
    %1444 = vperm.xlu0 %1443, %v1290
    %v1445 = vpop.permute.xlu0 %1444
    %1448 = vset.pattern.permute.xlu0 0
    %1449 = vperm.xlu0 %1448, %v1291
    %v1450 = vpop.permute.xlu0 %1449
    %v1484 = vunpack.c.l.b16 %v1212
    %v1485 = vunpack.c.h.b16 %v1212
    %v1486 = vunpack.c.l.b16 %v1213
    %v1487 = vunpack.c.h.b16 %v1213
    %v1488 = vunpack.c.l.b16 %v1214
    %v1489 = vunpack.c.h.b16 %v1214
    %v1490 = vunpack.c.l.b16 %v1215
    %v1491 = vunpack.c.h.b16 %v1215
    %v1492 = vunpack.c.l.b16 %v1216
    %v1493 = vunpack.c.h.b16 %v1216
    %v1494 = vunpack.c.l.b16 %v1217
    %v1495 = vunpack.c.h.b16 %v1217
    %v1496 = vunpack.c.l.b16 %v1218
    %v1497 = vunpack.c.h.b16 %v1218
    %v1498 = vunpack.c.l.b16 %v1219
    %v1499 = vunpack.c.h.b16 %v1219
    %v1500 = vunpack.c.l.b16 %v1220
    %v1501 = vunpack.c.h.b16 %v1220
    %v1502 = vunpack.c.l.b16 %v1221
    %v1503 = vunpack.c.h.b16 %v1221
    %v1504 = vunpack.c.l.b16 %v1222
    %v1505 = vunpack.c.h.b16 %v1222
    %v1506 = vunpack.c.l.b16 %v1223
    %v1507 = vunpack.c.h.b16 %v1223
    %v1508 = vunpack.c.l.b16 %v1224
    %v1509 = vunpack.c.h.b16 %v1224
    %v1510 = vunpack.c.l.b16 %v1225
    %v1511 = vunpack.c.h.b16 %v1225
    %v1512 = vunpack.c.l.b16 %v1226
    %v1513 = vunpack.c.h.b16 %v1226
    %v1514 = vunpack.c.l.b16 %v1227
    %v1515 = vunpack.c.h.b16 %v1227
    %v1516 = vunpack.c.l.b16 %v1228
    %v1517 = vunpack.c.h.b16 %v1228
    %v1518 = vunpack.c.l.b16 %v1229
    %v1519 = vunpack.c.h.b16 %v1229
    %v1520 = vunpack.c.l.b16 %v1230
    %v1521 = vunpack.c.h.b16 %v1230
    %v1522 = vunpack.c.l.b16 %v1231
    %v1523 = vunpack.c.h.b16 %v1231
    %v1524 = vunpack.c.l.b16 %v1232
    %v1525 = vunpack.c.h.b16 %v1232
    %v1526 = vunpack.c.l.b16 %v1233
    %v1527 = vunpack.c.h.b16 %v1233
    %v1528 = vunpack.c.l.b16 %v1234
    %v1529 = vunpack.c.h.b16 %v1234
    %v1530 = vunpack.c.l.b16 %v1235
    %v1531 = vunpack.c.h.b16 %v1235
    %v1532 = vunpack.c.l.b16 %v1236
    %v1533 = vunpack.c.h.b16 %v1236
    %v1534 = vunpack.c.l.b16 %v1237
    %v1535 = vunpack.c.h.b16 %v1237
    %v1536 = vunpack.c.l.b16 %v1238
    %v1537 = vunpack.c.h.b16 %v1238
    %v1538 = vunpack.c.l.b16 %v1239
    %v1539 = vunpack.c.h.b16 %v1239
    %v1540 = vunpack.c.l.b16 %v1240
    %v1541 = vunpack.c.h.b16 %v1240
    %v1542 = vunpack.c.l.b16 %v1241
    %v1543 = vunpack.c.h.b16 %v1241
    %v1544 = vunpack.c.l.b16 %v1242
    %v1545 = vunpack.c.h.b16 %v1242
    %v1546 = vunpack.c.l.b16 %v1243
    %v1547 = vunpack.c.h.b16 %v1243
    %v1548 = vpack.c.b16 %v1486, %v1484
    %v1549 = vpack.c.b16 %v1487, %v1485
    %v1550 = vpack.c.b16 %v1490, %v1488
    %v1551 = vpack.c.b16 %v1491, %v1489
    %v1552 = vpack.c.b16 %v1494, %v1492
    %v1553 = vpack.c.b16 %v1495, %v1493
    %v1554 = vpack.c.b16 %v1498, %v1496
    %v1555 = vpack.c.b16 %v1499, %v1497
    %v1556 = vpack.c.b16 %v1502, %v1500
    %v1557 = vpack.c.b16 %v1503, %v1501
    %v1558 = vpack.c.b16 %v1506, %v1504
    %v1559 = vpack.c.b16 %v1507, %v1505
    %v1560 = vpack.c.b16 %v1510, %v1508
    %v1561 = vpack.c.b16 %v1511, %v1509
    %v1562 = vpack.c.b16 %v1514, %v1512
    %v1563 = vpack.c.b16 %v1515, %v1513
    %v1564 = vpack.c.b16 %v1518, %v1516
    %v1565 = vpack.c.b16 %v1519, %v1517
    %v1566 = vpack.c.b16 %v1522, %v1520
    %v1567 = vpack.c.b16 %v1523, %v1521
    %v1568 = vpack.c.b16 %v1526, %v1524
    %v1569 = vpack.c.b16 %v1527, %v1525
    %v1570 = vpack.c.b16 %v1530, %v1528
    %v1571 = vpack.c.b16 %v1531, %v1529
    %v1572 = vpack.c.b16 %v1534, %v1532
    %v1573 = vpack.c.b16 %v1535, %v1533
    %v1574 = vpack.c.b16 %v1538, %v1536
    %v1575 = vpack.c.b16 %v1539, %v1537
    %v1576 = vpack.c.b16 %v1542, %v1540
    %v1577 = vpack.c.b16 %v1543, %v1541
    %v1578 = vpack.c.b16 %v1546, %v1544
    %v1579 = vpack.c.b16 %v1547, %v1545
    %1612 = vmatprep.subr.bf16.mxu0 0
    %1613 = vmatpush1.bf16.msra.mxu0 %v1251
    %1614 = vmatprep.subr.bf16.mxu0 0
    %1615 = vmatpush1.bf16.msra.mxu0 %v1250
    %1616 = vmatprep.subr.bf16.mxu0 0
    %1617 = vmatpush1.bf16.msra.mxu0 %v1249
    %1618 = vmatprep.subr.bf16.mxu0 0
    %1619 = vmatpush1.bf16.msra.mxu0 %v1248
    %1620 = vmatprep.subr.bf16.mxu0 0
    %1621 = vmatpush1.bf16.msra.mxu0 %v1247
    %1622 = vmatprep.subr.bf16.mxu0 0
    %1623 = vmatpush1.bf16.msra.mxu0 %v1246
    %1624 = vmatprep.subr.bf16.mxu0 0
    %1625 = vmatpush1.bf16.msra.mxu0 %v1245
    %1626 = vmatprep.subr.bf16.mxu0 0
    %1627 = vmatpush1.bf16.msra.mxu0 %v1244
    %1628 = vmatprep.subr.bf16.mxu0 0
    %1629 = vmatpush2.bf16.msra.mxu0 %v1259
    %1630 = vmatprep.subr.bf16.mxu0 0
    %1631 = vmatpush2.bf16.msra.mxu0 %v1258
    %1632 = vmatprep.subr.bf16.mxu0 0
    %1633 = vmatpush2.bf16.msra.mxu0 %v1257
    %1634 = vmatprep.subr.bf16.mxu0 0
    %1635 = vmatpush2.bf16.msra.mxu0 %v1256
    %1636 = vmatprep.subr.bf16.mxu0 0
    %1637 = vmatpush2.bf16.msra.mxu0 %v1255
    %1638 = vmatprep.subr.bf16.mxu0 0
    %1639 = vmatpush2.bf16.msra.mxu0 %v1254
    %1640 = vmatprep.subr.bf16.mxu0 0
    %1641 = vmatpush2.bf16.msra.mxu0 %v1253
    %1642 = vmatprep.subr.bf16.mxu0 0
    %1643 = vmatpush2.bf16.msra.mxu0 %v1252
    %1644 = vmatprep.mubr.bf16.mxu0 %v1549
    %1645 = vmatmul.mubr.bf16.gmra.mxu0 %v1548
    %v1646 = vpop.f32.mrf.mxu0
    %v1647 = vadd.f32 %v1295, %v1646
    %v1648 = vpop.f32.mrf.mxu0
    %v1649 = vpop.f32.mrf.mxu0
    %v1650 = vadd.f32 %v1300, %v1649
    %v1651 = vpop.f32.mrf.mxu0
    %1652 = vmatprep.mubr.bf16.mxu0 %v1551
    %1653 = vmatmul.mubr.bf16.gmra.mxu0 %v1550
    %v1654 = vpop.f32.mrf.mxu0
    %v1655 = vadd.f32 %v1305, %v1654
    %v1656 = vpop.f32.mrf.mxu0
    %v1657 = vpop.f32.mrf.mxu0
    %v1658 = vadd.f32 %v1310, %v1657
    %v1659 = vpop.f32.mrf.mxu0
    %1660 = vmatprep.mubr.bf16.mxu0 %v1553
    %1661 = vmatmul.mubr.bf16.gmra.mxu0 %v1552
    %v1662 = vpop.f32.mrf.mxu0
    %v1663 = vadd.f32 %v1315, %v1662
    %v1664 = vpop.f32.mrf.mxu0
    %v1665 = vpop.f32.mrf.mxu0
    %v1666 = vadd.f32 %v1320, %v1665
    %v1667 = vpop.f32.mrf.mxu0
    %1668 = vmatprep.mubr.bf16.mxu0 %v1555
    %1669 = vmatmul.mubr.bf16.gmra.mxu0 %v1554
    %v1670 = vpop.f32.mrf.mxu0
    %v1671 = vadd.f32 %v1325, %v1670
    %v1672 = vpop.f32.mrf.mxu0
    %v1673 = vpop.f32.mrf.mxu0
    %v1674 = vadd.f32 %v1330, %v1673
    %v1675 = vpop.f32.mrf.mxu0
    %1676 = vmatprep.mubr.bf16.mxu0 %v1557
    %1677 = vmatmul.mubr.bf16.gmra.mxu0 %v1556
    %v1678 = vpop.f32.mrf.mxu0
    %v1679 = vadd.f32 %v1335, %v1678
    %v1680 = vpop.f32.mrf.mxu0
    %v1681 = vpop.f32.mrf.mxu0
    %v1682 = vadd.f32 %v1340, %v1681
    %v1683 = vpop.f32.mrf.mxu0
    %1684 = vmatprep.mubr.bf16.mxu0 %v1559
    %1685 = vmatmul.mubr.bf16.gmra.mxu0 %v1558
    %v1686 = vpop.f32.mrf.mxu0
    %v1687 = vadd.f32 %v1345, %v1686
    %v1688 = vpop.f32.mrf.mxu0
    %v1689 = vpop.f32.mrf.mxu0
    %v1690 = vadd.f32 %v1350, %v1689
    %v1691 = vpop.f32.mrf.mxu0
    %1692 = vmatprep.mubr.bf16.mxu0 %v1561
    %1693 = vmatmul.mubr.bf16.gmra.mxu0 %v1560
    %v1694 = vpop.f32.mrf.mxu0
    %v1695 = vadd.f32 %v1355, %v1694
    %v1696 = vpop.f32.mrf.mxu0
    %v1697 = vpop.f32.mrf.mxu0
    %v1698 = vadd.f32 %v1360, %v1697
    %v1699 = vpop.f32.mrf.mxu0
    %1700 = vmatprep.mubr.bf16.mxu0 %v1563
    %1701 = vmatmul.mubr.bf16.gmra.mxu0 %v1562
    %v1702 = vpop.f32.mrf.mxu0
    %v1703 = vadd.f32 %v1365, %v1702
    %v1704 = vpop.f32.mrf.mxu0
    %v1705 = vpop.f32.mrf.mxu0
    %v1706 = vadd.f32 %v1370, %v1705
    %v1707 = vpop.f32.mrf.mxu0
    %1708 = vmatprep.mubr.bf16.mxu0 %v1565
    %1709 = vmatmul.mubr.bf16.gmra.mxu0 %v1564
    %v1710 = vpop.f32.mrf.mxu0
    %v1711 = vadd.f32 %v1375, %v1710
    %v1712 = vpop.f32.mrf.mxu0
    %v1713 = vpop.f32.mrf.mxu0
    %v1714 = vadd.f32 %v1380, %v1713
    %v1715 = vpop.f32.mrf.mxu0
    %1716 = vmatprep.mubr.bf16.mxu0 %v1567
    %1717 = vmatmul.mubr.bf16.gmra.mxu0 %v1566
    %v1718 = vpop.f32.mrf.mxu0
    %v1719 = vadd.f32 %v1385, %v1718
    %v1720 = vpop.f32.mrf.mxu0
    %v1721 = vpop.f32.mrf.mxu0
    %v1722 = vadd.f32 %v1390, %v1721
    %v1723 = vpop.f32.mrf.mxu0
    %1724 = vmatprep.mubr.bf16.mxu0 %v1569
    %1725 = vmatmul.mubr.bf16.gmra.mxu0 %v1568
    %v1726 = vpop.f32.mrf.mxu0
    %v1727 = vadd.f32 %v1395, %v1726
    %v1728 = vpop.f32.mrf.mxu0
    %v1729 = vpop.f32.mrf.mxu0
    %v1730 = vadd.f32 %v1400, %v1729
    %v1731 = vpop.f32.mrf.mxu0
    %1732 = vmatprep.mubr.bf16.mxu0 %v1571
    %1733 = vmatmul.mubr.bf16.gmra.mxu0 %v1570
    %v1734 = vpop.f32.mrf.mxu0
    %v1735 = vadd.f32 %v1405, %v1734
    %v1736 = vpop.f32.mrf.mxu0
    %v1737 = vpop.f32.mrf.mxu0
    %v1738 = vadd.f32 %v1410, %v1737
    %v1739 = vpop.f32.mrf.mxu0
    %1740 = vmatprep.mubr.bf16.mxu0 %v1573
    %1741 = vmatmul.mubr.bf16.gmra.mxu0 %v1572
    %v1742 = vpop.f32.mrf.mxu0
    %v1743 = vadd.f32 %v1415, %v1742
    %v1744 = vpop.f32.mrf.mxu0
    %v1745 = vpop.f32.mrf.mxu0
    %v1746 = vadd.f32 %v1420, %v1745
    %v1747 = vpop.f32.mrf.mxu0
    %1748 = vmatprep.mubr.bf16.mxu0 %v1575
    %1749 = vmatmul.mubr.bf16.gmra.mxu0 %v1574
    %v1750 = vpop.f32.mrf.mxu0
    %v1751 = vadd.f32 %v1425, %v1750
    %v1752 = vpop.f32.mrf.mxu0
    %v1753 = vpop.f32.mrf.mxu0
    %v1754 = vadd.f32 %v1430, %v1753
    %v1755 = vpop.f32.mrf.mxu0
    %1756 = vmatprep.mubr.bf16.mxu0 %v1577
    %1757 = vmatmul.mubr.bf16.gmra.mxu0 %v1576
    %v1758 = vpop.f32.mrf.mxu0
    %v1759 = vadd.f32 %v1435, %v1758
    %v1760 = vpop.f32.mrf.mxu0
    %v1761 = vpop.f32.mrf.mxu0
    %v1762 = vadd.f32 %v1440, %v1761
    %v1763 = vpop.f32.mrf.mxu0
    %1764 = vmatprep.mubr.bf16.mxu0 %v1579
    %1765 = vmatmul.mubr.bf16.gmra.mxu0 %v1578
    %v1766 = vpop.f32.mrf.mxu0
    %v1767 = vadd.f32 %v1445, %v1766
    %v1768 = vpop.f32.mrf.mxu0
    %v1769 = vpop.f32.mrf.mxu0
    %v1770 = vadd.f32 %v1450, %v1769
    %v1771 = vpop.f32.mrf.mxu0
    %1772 = vdwg.mxu0
    %v1773 = vmax.f32 %v1647, 0.0
    %v1774 = vmax.f32 %v1650, 0.0
    %v1775 = vmax.f32 %v1655, 0.0
    %v1776 = vmax.f32 %v1658, 0.0
    %v1777 = vmax.f32 %v1663, 0.0
    %v1778 = vmax.f32 %v1666, 0.0
    %v1779 = vmax.f32 %v1671, 0.0
    %v1780 = vmax.f32 %v1674, 0.0
    %v1781 = vmax.f32 %v1679, 0.0
    %v1782 = vmax.f32 %v1682, 0.0
    %v1783 = vmax.f32 %v1687, 0.0
    %v1784 = vmax.f32 %v1690, 0.0
    %v1785 = vmax.f32 %v1695, 0.0
    %v1786 = vmax.f32 %v1698, 0.0
    %v1787 = vmax.f32 %v1703, 0.0
    %v1788 = vmax.f32 %v1706, 0.0
    %v1789 = vmax.f32 %v1711, 0.0
    %v1790 = vmax.f32 %v1714, 0.0
    %v1791 = vmax.f32 %v1719, 0.0
    %v1792 = vmax.f32 %v1722, 0.0
    %v1793 = vmax.f32 %v1727, 0.0
    %v1794 = vmax.f32 %v1730, 0.0
    %v1795 = vmax.f32 %v1735, 0.0
    %v1796 = vmax.f32 %v1738, 0.0
    %v1797 = vmax.f32 %v1743, 0.0
    %v1798 = vmax.f32 %v1746, 0.0
    %v1799 = vmax.f32 %v1751, 0.0
    %v1800 = vmax.f32 %v1754, 0.0
    %v1801 = vmax.f32 %v1759, 0.0
    %v1802 = vmax.f32 %v1762, 0.0
    %v1803 = vmax.f32 %v1767, 0.0
    %v1804 = vmax.f32 %v1770, 0.0
    %v1805 = vld [vmem:[%s7] sm:$0x3]
    %v1806 = vld [vmem:[#allocation2] sm:$0x1]
    %1808 = vset.pattern.permute.xlu0 0
    %1809 = vperm.xlu0 %1808, %v1806
    %v1810 = vpop.permute.xlu0 %1809
    %v1812 = vlaneseq
    %v1813 = vshrl.u32 %v1812, 7
    %v1814 = vsub.s32 0, %v1813
    %v1815 = vrot.slane %v1810, %v1814
    %v1817 = vlaneseq
    %v1818 = vshrl.u32 %v1817, 7
    %v1819 = vsub.s32 0, %v1818
    %v1820 = vrot.slane %v1805, %v1819
    %v1821 = vlaneseq
    %v1822 = vshrl.u32 %v1821, 7
    %v1823 = vsub.s32 1, %v1822
    %v1824 = vrot.slane %v1805, %v1823
    %1827 = vmatprep.subr.mxu0 0.0
    %1828 = vmatpush1.msra.mxu0 %v1788
    %1829 = vmatprep.subr.mxu0 0.0
    %1830 = vmatpush1.msra.mxu0 %v1787
    %1831 = vmatprep.subr.mxu0 0.0
    %1832 = vmatpush1.msra.mxu0 %v1786
    %1833 = vmatprep.subr.mxu0 0.0
    %1834 = vmatpush1.msra.mxu0 %v1785
    %1835 = vmatprep.subr.mxu0 0.0
    %1836 = vmatpush1.msra.mxu0 %v1784
    %1837 = vmatprep.subr.mxu0 0.0
    %1838 = vmatpush1.msra.mxu0 %v1783
    %1839 = vmatprep.subr.mxu0 0.0
    %1840 = vmatpush1.msra.mxu0 %v1782
    %1841 = vmatprep.subr.mxu0 0.0
    %1842 = vmatpush1.msra.mxu0 %v1781
    %1843 = vmatprep.subr.mxu0 0.0
    %1844 = vmatpush1.msra.mxu0 %v1780
    %1845 = vmatprep.subr.mxu0 0.0
    %1846 = vmatpush1.msra.mxu0 %v1779
    %1847 = vmatprep.subr.mxu0 0.0
    %1848 = vmatpush1.msra.mxu0 %v1778
    %1849 = vmatprep.subr.mxu0 0.0
    %1850 = vmatpush1.msra.mxu0 %v1777
    %1851 = vmatprep.subr.mxu0 0.0
    %1852 = vmatpush1.msra.mxu0 %v1776
    %1853 = vmatprep.subr.mxu0 0.0
    %1854 = vmatpush1.msra.mxu0 %v1775
    %1855 = vmatprep.subr.mxu0 0.0
    %1856 = vmatpush1.msra.mxu0 %v1774
    %1857 = vmatprep.subr.mxu0 0.0
    %1858 = vmatpush1.msra.mxu0 %v1773
    %1859 = vmatprep.subr.mxu0 0.0
    %1860 = vmatpush2.msra.mxu0 %v1804
    %1861 = vmatprep.subr.mxu0 0.0
    %1862 = vmatpush2.msra.mxu0 %v1803
    %1863 = vmatprep.subr.mxu0 0.0
    %1864 = vmatpush2.msra.mxu0 %v1802
    %1865 = vmatprep.subr.mxu0 0.0
    %1866 = vmatpush2.msra.mxu0 %v1801
    %1867 = vmatprep.subr.mxu0 0.0
    %1868 = vmatpush2.msra.mxu0 %v1800
    %1869 = vmatprep.subr.mxu0 0.0
    %1870 = vmatpush2.msra.mxu0 %v1799
    %1871 = vmatprep.subr.mxu0 0.0
    %1872 = vmatpush2.msra.mxu0 %v1798
    %1873 = vmatprep.subr.mxu0 0.0
    %1874 = vmatpush2.msra.mxu0 %v1797
    %1875 = vmatprep.subr.mxu0 0.0
    %1876 = vmatpush2.msra.mxu0 %v1796
    %1877 = vmatprep.subr.mxu0 0.0
    %1878 = vmatpush2.msra.mxu0 %v1795
    %1879 = vmatprep.subr.mxu0 0.0
    %1880 = vmatpush2.msra.mxu0 %v1794
    %1881 = vmatprep.subr.mxu0 0.0
    %1882 = vmatpush2.msra.mxu0 %v1793
    %1883 = vmatprep.subr.mxu0 0.0
    %1884 = vmatpush2.msra.mxu0 %v1792
    %1885 = vmatprep.subr.mxu0 0.0
    %1886 = vmatpush2.msra.mxu0 %v1791
    %1887 = vmatprep.subr.mxu0 0.0
    %1888 = vmatpush2.msra.mxu0 %v1790
    %1889 = vmatprep.subr.mxu0 0.0
    %1890 = vmatpush2.msra.mxu0 %v1789
    %1891 = vmatprep.mubr.f32.mxu0 %v1824
    %1892 = vmatmul.mubr.f32.gmra.mxu0 %v1820
    %v1893 = vpop.f32.mrf.mxu0
    %v1894 = vadd.f32 %v1815, %v1893
    %v1895 = vpop.f32.mrf.mxu0
    %1896 = vdwg.mxu0
    %v1897 = vmax.f32 %v1894, 0.0
    %vm1898 = vcmask 57344
    %1899 = vst.msk [vmem:[#allocation3] sm:$0x1] %vm1898, %v1897
    // Predicated region
    $region38: #{tpu_custom_call.1} parent=1 // pred_check
      _
    $region39: #{tpu_custom_call.1} parent=1 // pred_check_branch
      %1901 = sbr.rel (0) target = $region41
    $region40: #{tpu_custom_call.1} parent=1 // pred_region
      %s1903 = ssub.s32 16, 16
      %1904 = vsyncadd [#allocation4], %s1903
      %s1906 = sshll.u32 [#allocation3], 4
      %s1907 = int_to_ptr.vmem [resolvable:$true] %s1906
      %1909 = dma.vmem_to_hbm [thread:$0]  %s1907, 16, %s9, [#allocation4]
    $region41: #{tpu_custom_call.1} parent=1 // pred_fallthru
      _
    // Predicated region
    $region42: #{tpu_custom_call.1} parent=1 // pred_check
      _
    $region43: #{tpu_custom_call.1} parent=1 // pred_check_branch
      %1911 = sbr.rel (0) target = $region45
    $region44: #{tpu_custom_call.1} parent=1 // pred_region
      %1912 = dma.done [#allocation4], 16
    $region45: #{tpu_custom_call.1} parent=1 // pred_fallthru
      _
    %1913 = vsyncpa [#allocation4], 1

</llo_original>
